<compile_context>
chip_gen: v6e
topology: v6e:2x2x1
jax: 0.10.0
libtpu: 0.0.40
codegen_flags: <defaults>
</compile_context>

<pallas_src>
import functools

import jax
import jax.numpy as jnp
from jax.experimental import pallas as pl
from jax.experimental.pallas import tpu as pltpu

_LANE = 128


def _round_up(v, m):
    return ((v + m - 1) // m) * m


def _pick_tile(n, pref):
    """Largest 128-multiple <= pref that divides n (n is a 128-multiple)."""
    t = min(pref, n)
    t = max(_LANE, (t // _LANE) * _LANE)
    while t > _LANE and n % t:
        t -= _LANE
    return t if n % t == 0 else n


def _vmem_cap_bytes():
    """Generation-aware VMEM request ceiling (~75% of physical)."""
    cap = 64 << 20                                   # conservative fallback (v7x)
    try:
        info = pltpu.get_tpu_info()
        cap = int(getattr(info, "vmem_capacity_bytes", cap))
    except Exception:
        pass
    return min((cap * 3) // 4, 100 << 20)


# ----------------------------------------------------------------------------
# Kernel 1: projection.
#   h[hd]     = sum_g x[g] @ W[hd, g]        (f32 accumulate, stored bf16)
#   f_src[hd] = sum(h * a_src[hd], -1)        lane-dense (1, tile) store
#   f_dst[hd] = sum(h * a_dst[hd], -1)        lane-dense (1, tile) store
# x arrives already grouped per previous-layer head (G, N, Fin), so no
# transpose/reshape between layers is needed.
# ----------------------------------------------------------------------------
def _proj_kernel(x_ref, w_ref, asrc_ref, adst_ref, h_ref, fs_ref, fd_ref, *,
                 nhead, ngroup):
    for hd in range(nhead):
        acc = jnp.dot(x_ref[0], w_ref[hd, 0],
                      preferred_element_type=jnp.float32)        # (tmp, hp)
        for g in range(1, ngroup):
            acc += jnp.dot(x_ref[g], w_ref[hd, g],
                           preferred_element_type=jnp.float32)
        h_ref[hd] = acc.astype(h_ref.dtype)                       # bf16 value path
        # lane-dense (1, tile) stores: transpose of the (tile, 1) reduce (XLU).
        fs_ref[hd] = jnp.sum(acc * asrc_ref[hd], axis=-1, keepdims=True).T
        fd_ref[hd] = jnp.sum(acc * adst_ref[hd], axis=-1, keepdims=True).T


def gat_projection(x3, w4, asrc, adst, *, row_tile):
    g, n, fin = x3.shape
    nhead, _, _, hp = w4.shape
    kernel = functools.partial(_proj_kernel, nhead=nhead, ngroup=g)
    return pl.pallas_call(
        kernel,
        out_shape=(jax.ShapeDtypeStruct((nhead, n, hp), jnp.bfloat16),
                   jax.ShapeDtypeStruct((nhead, 1, n), jnp.float32),
                   jax.ShapeDtypeStruct((nhead, 1, n), jnp.float32)),
        grid_spec=pltpu.PrefetchScalarGridSpec(
            num_scalar_prefetch=0,
            grid=(n // row_tile,),
            in_specs=[pl.BlockSpec((g, row_tile, fin), lambda i: (0, i, 0)),
                      pl.BlockSpec((nhead, g, fin, hp), lambda i: (0, 0, 0, 0)),
                      pl.BlockSpec((nhead, 1, hp), lambda i: (0, 0, 0)),
                      pl.BlockSpec((nhead, 1, hp), lambda i: (0, 0, 0))],
            out_specs=[pl.BlockSpec((nhead, row_tile, hp), lambda i: (0, i, 0)),
                       pl.BlockSpec((nhead, 1, row_tile), lambda i: (0, 0, i)),
                       pl.BlockSpec((nhead, 1, row_tile), lambda i: (0, 0, i))]),
        compiler_params=pltpu.CompilerParams(
            dimension_semantics=("parallel",)),
    )(x3, w4, asrc, adst)


# ----------------------------------------------------------------------------
# Kernel 2: tiled masked attention with online softmax (flash-style).
#   s[i,j] = leakyrelu(f_src[i] + f_dst[j])  for adj[i,j] != 0
#   att    = row-softmax (eps=1e-16 denominator)
#   out    = att @ h     (bf16 MXU, f32 accumulate; optional fused ELU)
# ----------------------------------------------------------------------------
def _gat_attn_kernel(fs_ref, fd_ref, hk_ref, adj_ref, o_ref,
                     m_sc, l_sc, acc_sc, *, nhead, tn, leaky_slope,
                     apply_elu, resident):
    j = pl.program_id(1)

    @pl.when(j == 0)
    def _():
        m_sc[...] = jnp.full_like(m_sc, -jnp.inf)
        l_sc[...] = jnp.zeros_like(l_sc)
        acc_sc[...] = jnp.zeros_like(acc_sc)

    mask = adj_ref[...] != 0                          # int8 compare, no f32 unpack
    neg_big = jnp.float32(-1e30)

    # nhead is small (default 1); unrolled head loop keeps the schedule visible.
    for hd in range(nhead):
        fs = fs_ref[hd].T                             # (1, tm) -> (tm, 1), XLU
        fd = fd_ref[hd]                               # (1, tn)
        if resident:
            k0 = pl.multiple_of(j * tn, tn)
            hk = hk_ref[hd, pl.ds(k0, tn), :]         # (tn, hp) bf16, VMEM-resident
        else:
            hk = hk_ref[hd]                           # (tn, hp) bf16, streamed

        s = fs + fd                                   # (tm, tn)
        s = jnp.where(s > 0, s, leaky_slope * s)      # LeakyReLU
        s = jnp.where(mask, s, neg_big)               # mask BEFORE exp

        m_prev = m_sc[hd]                             # (tm, 1)
        m_new = jnp.maximum(m_prev, jnp.max(s, axis=-1, keepdims=True))
        rescale = jnp.exp(m_prev - m_new)             # arg <= 0, no inf
        # Guard is load-bearing: fully-masked row slices have m_new == -1e30.
        p = jnp.where(mask, jnp.exp(s - m_new), 0.0)

        l_sc[hd] = rescale * l_sc[hd] + jnp.sum(p, axis=-1, keepdims=True)
        acc_sc[hd] = rescale * acc_sc[hd] + jnp.dot(
            p.astype(jnp.bfloat16), hk, preferred_element_type=jnp.float32)
        m_sc[hd] = m_new

    @pl.when(j == pl.num_programs(1) - 1)
    def _():
        out = acc_sc[...] / (l_sc[...] + jnp.float32(1e-16))
        if apply_elu:
            out = jnp.where(out > 0, out, jnp.exp(out) - 1.0)   # ELU(alpha=1)
        o_ref[...] = out.astype(o_ref.dtype)


def gat_attention(f_src, f_dst, h_all, adj_i8, *, tm, tn,
                  leaky_slope=0.2, apply_elu=False):
    nhead, n, hp = h_all.shape
    grid = (n // tm, n // tn)
    cap = _vmem_cap_bytes()

    def est(resident):
        b = 2 * tm * tn                               # int8 adjacency (2 bufs)
        b += 2 * nhead * 8 * tm * 4                   # f_src blocks (sublane pad)
        b += 2 * nhead * 8 * tn * 4                   # f_dst blocks (sublane pad)
        if resident:
            b += 2 * nhead * n * hp * 2               # resident bf16 h (2 bufs)
        else:
            b += 2 * nhead * tn * hp * 2              # streamed bf16 h tile
        b += 2 * nhead * tm * hp * 4                  # output block
        b += nhead * tm * hp * 4                      # acc scratch
        b += 2 * nhead * tm * _LANE * 4               # m/l scratch (lane padded)
        b += 8 * tm * tn * 4                          # elementwise temporaries
        return b

    resident = est(True) + (8 << 20) <= cap
    vmem_bytes = int(min(cap, est(resident) + (8 << 20)))

    if resident:
        hk_spec = pl.BlockSpec((nhead, n, hp), lambda i, j: (0, 0, 0))
    else:
        hk_spec = pl.BlockSpec((nhead, tn, hp), lambda i, j: (0, j, 0))

    kernel = functools.partial(_gat_attn_kernel, nhead=nhead, tn=tn,
                               leaky_slope=leaky_slope, apply_elu=apply_elu,
                               resident=resident)
    return pl.pallas_call(
        kernel,
        out_shape=jax.ShapeDtypeStruct((nhead, n, hp), jnp.float32),
        grid_spec=pltpu.PrefetchScalarGridSpec(
            num_scalar_prefetch=0,
            grid=grid,
            in_specs=[pl.BlockSpec((nhead, 1, tm), lambda i, j: (0, 0, i)),
                      pl.BlockSpec((nhead, 1, tn), lambda i, j: (0, 0, j)),
                      hk_spec,
                      pl.BlockSpec((tm, tn), lambda i, j: (i, j))],
            out_specs=pl.BlockSpec((nhead, tm, hp), lambda i, j: (0, i, 0)),
            scratch_shapes=[pltpu.VMEM((nhead, tm, 1), jnp.float32),
                            pltpu.VMEM((nhead, tm, 1), jnp.float32),
                            pltpu.VMEM((nhead, tm, hp), jnp.float32)]),
        compiler_params=pltpu.CompilerParams(
            dimension_semantics=("parallel", "arbitrary"),
            vmem_limit_bytes=vmem_bytes),
    )(f_src, f_dst, h_all, adj_i8)


# ----------------------------------------------------------------------------
# One GraphAttConv layer (all heads) + optional fused ELU.
# Input/output stay in the grouped lane-padded layout (G, N_pad, hp); the
# per-layer slice/transpose/reshape round-trips are gone.
# ----------------------------------------------------------------------------
def gat_conv_layer(x3, in_per_group, layer_heads, adj_i8, *, apply_elu,
                   row_tile_pref=512, key_tile_pref=1024):
    g, n, fin = x3.shape
    nhead = len(layer_heads)
    hh = layer_heads[0][0].shape[1]
    hp = _round_up(hh, _LANE)

    def pad_w(w):                                     # (G*in_per_group, hh) -> (G,Fin,hp)
        blocks = []
        for gi in range(g):
            blk = w[gi * in_per_group:(gi + 1) * in_per_group, :]
            blocks.append(jnp.pad(blk, ((0, fin - in_per_group), (0, hp - hh))))
        return jnp.stack(blocks)

    w4 = jnp.stack([pad_w(w) for (w, _, _) in layer_heads])          # (nhead,G,Fin,hp)
    asrc = jnp.stack([jnp.pad(a, ((0, 0), (0, hp - hh)))
                      for (_, a, _) in layer_heads])                 # (nhead,1,hp)
    adst = jnp.stack([jnp.pad(a, ((0, 0), (0, hp - hh)))
                      for (_, _, a) in layer_heads])                 # (nhead,1,hp)

    proj_tile = _pick_tile(n, 512)
    h_all, f_src, f_dst = gat_projection(x3, w4, asrc, adst, row_tile=proj_tile)

    # >= 2 row tiles so the "parallel" row axis shards across v7x's 2 TensorCores.
    row_pref = min(row_tile_pref, max(_LANE, ((n // 2) // _LANE) * _LANE))
    tm = _pick_tile(n, row_pref)
    tn = _pick_tile(n, key_tile_pref)
    return gat_attention(f_src, f_dst, h_all, adj_i8, tm=tm, tn=tn,
                         leaky_slope=0.2, apply_elu=apply_elu)       # (nhead,N_pad,hp)


# ----------------------------------------------------------------------------
# DeepGAT forward (nlayer-1 hidden GraphAttConv + 1-head output layer).
# ----------------------------------------------------------------------------
def deep_gat_forward(x, adj, params):
    # TODO(synk): nn.Dropout (train mode) has no effect here; eval forward only.
    n, nfeat = x.shape
    n_pad = _round_up(max(n, 2 * _LANE), 2 * _LANE)   # 128-mult, >= 2 row tiles
    adj_i8 = jnp.pad((adj > 0).astype(jnp.int8),
                     ((0, n_pad - n), (0, n_pad - n)))
    x3 = jnp.pad(x, ((0, n_pad - n), (0, 0)))[None]   # (1, N_pad, nfeat)

    in_per_group = nfeat
    for layer_heads in params["hidden"]:
        # GraphAttConv -> PairNorm('None') (identity) -> ELU (fused in-kernel)
        x3 = gat_conv_layer(x3, in_per_group, layer_heads, adj_i8,
                            apply_elu=True)           # (nhead, N_pad, hp)
        in_per_group = layer_heads[0][0].shape[1]

    w_out, _, _ = params["out"]
    out3 = gat_conv_layer(x3, in_per_group, [params["out"]], adj_i8,
                          apply_elu=False)            # (1, N_pad, hp_out)
    return out3[0, :n, :w_out.shape[1]]               # (N, nclass)


# ----------------------------------------------------------------------------
# Deterministic parameter init (xavier_normal_, gain = calculate_gain('relu'))
# ----------------------------------------------------------------------------
def xavier_normal(key, shape, gain):
    fan_out, fan_in = shape[0], shape[1]   # torch: fan_in=size(1), fan_out=size(0)
    std = gain * (2.0 / (fan_in + fan_out)) ** 0.5
    return std * jax.random.normal(key, shape, dtype=jnp.float32)


def init_params(key, nfeat, nhid, nclass, nhead, nlayer):
    gain = 2.0 ** 0.5  # calculate_gain('relu')
    params = {"hidden": [], "out": None}
    out_perhead = nhid // nhead
    for i in range(nlayer - 1):
        in_f = nfeat if i == 0 else nhid
        heads = []
        for _ in range(nhead):
            key, k1, k2 = jax.random.split(key, 3)
            w = xavier_normal(k1, (in_f, out_perhead), gain)
            a = xavier_normal(k2, (1, 2 * out_perhead), gain)
            heads.append((w, a[:, :out_perhead], a[:, out_perhead:]))
        params["hidden"].append(heads)
    in_f = nfeat if nlayer == 1 else nhid
    key, k1, k2 = jax.random.split(key, 3)
    w = xavier_normal(k1, (in_f, nclass), gain)
    a = xavier_normal(k2, (1, 2 * nclass), gain)
    params["out"] = (w, a[:, :nclass], a[:, nclass:])
    return params


# ----------------------------------------------------------------------------
# Pure-JAX reference (dense-masked formulation, all f32) for correctness check.
# ----------------------------------------------------------------------------
def _ref_head(x, w, a_s, a_d, adj, apply_elu):
    h = x @ w
    s = (h @ a_s.T) + (h @ a_d.T).T
    s = jnp.where(s > 0, s, 0.2 * s)
    mask = adj > 0
    s_m = jnp.where(mask, s, -1e30)
    e = jnp.where(mask, jnp.exp(s_m - s_m.max(1, keepdims=True)), 0.0)
    att = e / (e.sum(1, keepdims=True) + 1e-16)
    out = att @ h
    return jnp.where(out > 0, out, jnp.exp(out) - 1.0) if apply_elu else out


def _ref_forward(x, adj, params):
    for layer_heads in params["hidden"]:
        outs = [_ref_head(x, w, a_s, a_d, adj, True)
                for (w, a_s, a_d) in layer_heads]
        x = jnp.concatenate(outs, axis=1) if len(outs) > 1 else outs[0]
    w, a_s, a_d = params["out"]
    return _ref_head(x, w, a_s, a_d, adj, False)


if __name__ == "__main__":
    # 1024 nodes -> attention grid (2, 1) with tm=512 / tn=1024 tiles (resident
    # bf16 h), projection grid (2,).
    N, NFEAT, NHID, NCLASS, NHEAD, NLAYER = 1024, 16, 32, 8, 1, 2

    key = jax.random.PRNGKey(0)
    kx, kadj, kp = jax.random.split(key, 3)

    x = jax.random.normal(kx, (N, NFEAT), dtype=jnp.float32)

    # random sparse adjacency (dense 0/1 mask) with guaranteed self-loops
    adj = (jax.random.uniform(kadj, (N, N)) < 0.01).astype(jnp.float32)
    adj = jnp.maximum(adj, jnp.eye(N, dtype=jnp.float32))

    params = init_params(kp, NFEAT, NHID, NCLASS, NHEAD, NLAYER)

    out = deep_gat_forward(x, adj, params)
    out = jax.block_until_ready(out)

    ref = _ref_forward(x, adj, params)
    assert out.shape == (N, NCLASS)
    # bf16 value-path matmuls -> loosened tolerance vs the all-f32 reference.
    assert jnp.allclose(out, ref, rtol=5e-2, atol=5e-2), "mismatch vs reference"

    print("KERNEL_OK")
</pallas_src>

<mosaic_0001>
module attributes {stable_mosaic.version = 11 : i64} {
  func.func @_proj_kernel(%arg0: i32, %arg1: memref<1x512x16xf32, #tpu.memory_space<vmem>>, %arg2: memref<1x1x16x128xf32, #tpu.memory_space<vmem>>, %arg3: memref<1x1x128xf32, #tpu.memory_space<vmem>>, %arg4: memref<1x1x128xf32, #tpu.memory_space<vmem>>, %arg5: memref<1x512x128xbf16, #tpu.memory_space<vmem>>, %arg6: memref<1x1x512xf32, #tpu.memory_space<vmem>>, %arg7: memref<1x1x512xf32, #tpu.memory_space<vmem>>) attributes {dimension_semantics = [#tpu.dimension_semantics<parallel>], iteration_bounds = array<i64: 2>, scalar_prefetch = 0 : i64, scratch_operands = 0 : i64, tpu.core_type = #tpu.core_type<tc>, window_params = [{transform_indices = @transform_0, window_bounds = array<i64: 1, 512, 16>}, {pipeline_mode = #tpu.pipeline_mode<synchronous>, transform_indices = @transform_1, window_bounds = array<i64: 1, 1, 16, 128>}, {pipeline_mode = #tpu.pipeline_mode<synchronous>, transform_indices = @transform_2, window_bounds = array<i64: 1, 1, 128>}, {pipeline_mode = #tpu.pipeline_mode<synchronous>, transform_indices = @transform_3, window_bounds = array<i64: 1, 1, 128>}, {transform_indices = @transform_4, window_bounds = array<i64: 1, 512, 128>}, {transform_indices = @transform_5, window_bounds = array<i64: 1, 1, 512>}, {transform_indices = @transform_6, window_bounds = array<i64: 1, 1, 512>}]} {
    %c0 = arith.constant 0 : index
    %c0_0 = arith.constant 0 : index
    %c0_1 = arith.constant 0 : index
    %0 = vector.load %arg1[%c0, %c0_0, %c0_1] : memref<1x512x16xf32, #tpu.memory_space<vmem>>, vector<1x512x16xf32>
    %1 = vector.shape_cast %0 : vector<1x512x16xf32> to vector<512x16xf32>
    %c0_2 = arith.constant 0 : index
    %c0_3 = arith.constant 0 : index
    %c0_4 = arith.constant 0 : index
    %c0_5 = arith.constant 0 : index
    %2 = vector.load %arg2[%c0_2, %c0_3, %c0_4, %c0_5] : memref<1x1x16x128xf32, #tpu.memory_space<vmem>>, vector<1x1x16x128xf32>
    %3 = vector.shape_cast %2 : vector<1x1x16x128xf32> to vector<16x128xf32>
    %cst = arith.constant dense<0.000000e+00> : vector<512x128xf32>
    %4 = tpu.matmul %1, %3, %cst {dimension_numbers = #tpu.dot_dimension_numbers<[1], [0], [0], [1], [0, 0, 1, 1], [], []>} : vector<512x16xf32>, vector<16x128xf32>, vector<512x128xf32> -> vector<512x128xf32>
    %5 = arith.truncf %4 : vector<512x128xf32> to vector<512x128xbf16>
    %c0_6 = arith.constant 0 : index
    %c0_7 = arith.constant 0 : index
    %c0_8 = arith.constant 0 : index
    %6 = vector.load %arg5[%c0_6, %c0_7, %c0_8] : memref<1x512x128xbf16, #tpu.memory_space<vmem>>, vector<1x512x128xbf16>
    %7 = vector.shape_cast %6 : vector<1x512x128xbf16> to vector<512x128xbf16>
    %8 = vector.shape_cast %5 : vector<512x128xbf16> to vector<1x512x128xbf16>
    tpu.vector_store %arg5[%c0_6, %c0_7, %c0_8], %8 {strides = array<i32>} : memref<1x512x128xbf16, #tpu.memory_space<vmem>>, vector<1x512x128xbf16>,
    %c0_9 = arith.constant 0 : index
    %c0_10 = arith.constant 0 : index
    %c0_11 = arith.constant 0 : index
    %9 = vector.load %arg3[%c0_9, %c0_10, %c0_11] : memref<1x1x128xf32, #tpu.memory_space<vmem>>, vector<1x1x128xf32>
    %10 = vector.shape_cast %9 : vector<1x1x128xf32> to vector<1x128xf32>
    %11 = vector.broadcast %10 : vector<1x128xf32> to vector<512x128xf32>
    %12 = arith.mulf %4, %11 : vector<512x128xf32>
    %cst_12 = arith.constant dense<0.000000e+00> : vector<512xf32>
    %13 = vector.multi_reduction <add>, %12, %cst_12 [1] : vector<512x128xf32> to vector<512xf32>
    %14 = vector.shape_cast %13 : vector<512xf32> to vector<512x1xf32>
    %15 = tpu.transpose %14, [1, 0] : vector<512x1xf32> -> vector<1x512xf32>
    %c0_13 = arith.constant 0 : index
    %c0_14 = arith.constant 0 : index
    %c0_15 = arith.constant 0 : index
    %16 = vector.load %arg6[%c0_13, %c0_14, %c0_15] : memref<1x1x512xf32, #tpu.memory_space<vmem>>, vector<1x1x512xf32>
    %17 = vector.shape_cast %16 : vector<1x1x512xf32> to vector<1x512xf32>
    %18 = vector.shape_cast %15 : vector<1x512xf32> to vector<1x1x512xf32>
    tpu.vector_store %arg6[%c0_13, %c0_14, %c0_15], %18 {strides = array<i32>} : memref<1x1x512xf32, #tpu.memory_space<vmem>>, vector<1x1x512xf32>,
    %c0_16 = arith.constant 0 : index
    %c0_17 = arith.constant 0 : index
    %c0_18 = arith.constant 0 : index
    %19 = vector.load %arg4[%c0_16, %c0_17, %c0_18] : memref<1x1x128xf32, #tpu.memory_space<vmem>>, vector<1x1x128xf32>
    %20 = vector.shape_cast %19 : vector<1x1x128xf32> to vector<1x128xf32>
    %21 = vector.broadcast %20 : vector<1x128xf32> to vector<512x128xf32>
    %22 = arith.mulf %4, %21 : vector<512x128xf32>
    %cst_19 = arith.constant dense<0.000000e+00> : vector<512xf32>
    %23 = vector.multi_reduction <add>, %22, %cst_19 [1] : vector<512x128xf32> to vector<512xf32>
    %24 = vector.shape_cast %23 : vector<512xf32> to vector<512x1xf32>
    %25 = tpu.transpose %24, [1, 0] : vector<512x1xf32> -> vector<1x512xf32>
    %c0_20 = arith.constant 0 : index
    %c0_21 = arith.constant 0 : index
    %c0_22 = arith.constant 0 : index
    %26 = vector.load %arg7[%c0_20, %c0_21, %c0_22] : memref<1x1x512xf32, #tpu.memory_space<vmem>>, vector<1x1x512xf32>
    %27 = vector.shape_cast %26 : vector<1x1x512xf32> to vector<1x512xf32>
    %28 = vector.shape_cast %25 : vector<1x512xf32> to vector<1x1x512xf32>
    tpu.vector_store %arg7[%c0_20, %c0_21, %c0_22], %28 {strides = array<i32>} : memref<1x1x512xf32, #tpu.memory_space<vmem>>, vector<1x1x512xf32>,
    return
  }
  func.func @transform_0(%arg0: i32) -> (i32, i32, i32) {
    %c0_i32 = arith.constant 0 : i32
    %c0_i32_0 = arith.constant 0 : i32
    %c0_i32_1 = arith.constant 0 : i32
    return %c0_i32, %arg0, %c0_i32_0 : i32, i32, i32
  }
  func.func @transform_1(%arg0: i32) -> (i32, i32, i32, i32) {
    %c0_i32 = arith.constant 0 : i32
    %c0_i32_0 = arith.constant 0 : i32
    %c0_i32_1 = arith.constant 0 : i32
    %c0_i32_2 = arith.constant 0 : i32
    %c0_i32_3 = arith.constant 0 : i32
    return %c0_i32, %c0_i32_0, %c0_i32_1, %c0_i32_2 : i32, i32, i32, i32
  }
  func.func @transform_2(%arg0: i32) -> (i32, i32, i32) {
    %c0_i32 = arith.constant 0 : i32
    %c0_i32_0 = arith.constant 0 : i32
    %c0_i32_1 = arith.constant 0 : i32
    %c0_i32_2 = arith.constant 0 : i32
    return %c0_i32, %c0_i32_0, %c0_i32_1 : i32, i32, i32
  }
  func.func @transform_3(%arg0: i32) -> (i32, i32, i32) {
    %c0_i32 = arith.constant 0 : i32
    %c0_i32_0 = arith.constant 0 : i32
    %c0_i32_1 = arith.constant 0 : i32
    %c0_i32_2 = arith.constant 0 : i32
    return %c0_i32, %c0_i32_0, %c0_i32_1 : i32, i32, i32
  }
  func.func @transform_4(%arg0: i32) -> (i32, i32, i32) {
    %c0_i32 = arith.constant 0 : i32
    %c0_i32_0 = arith.constant 0 : i32
    %c0_i32_1 = arith.constant 0 : i32
    return %c0_i32, %arg0, %c0_i32_0 : i32, i32, i32
  }
  func.func @transform_5(%arg0: i32) -> (i32, i32, i32) {
    %c0_i32 = arith.constant 0 : i32
    %c0_i32_0 = arith.constant 0 : i32
    %c0_i32_1 = arith.constant 0 : i32
    return %c0_i32, %c0_i32_0, %arg0 : i32, i32, i32
  }
  func.func @transform_6(%arg0: i32) -> (i32, i32, i32) {
    %c0_i32 = arith.constant 0 : i32
    %c0_i32_0 = arith.constant 0 : i32
    %c0_i32_1 = arith.constant 0 : i32
    return %c0_i32, %c0_i32_0, %arg0 : i32, i32, i32
  }
}

</mosaic_0001>

<llo_original>
// kernel: tpu_custom_call.1
$region0: #{tpu_custom_call.1}
  #allocation0 [shape = 'u32[]', space=smem, size = 0x4, offset = 0x4, fixed_abs, tag = 'smem constant byte address 0x4 - core index']
  #allocation1 [shape = 'u32[144,128]{1,0:T(1,128)}', space=vmem, size = 0x12000, scoped, tag = 'internal scratch']
  %s0 = inlined_call_operand.vmem [shape: f32[1,1024,16], index: 0, kind: input, shape index: {}]
  %s1 = inlined_call_operand.vmem [shape: f32[1,1,16,128], index: 1, kind: input, shape index: {}]
  %s2 = inlined_call_operand.vmem [shape: f32[1,1,128], index: 2, kind: input, shape index: {}]
  %s3 = inlined_call_operand.vmem [shape: f32[1,1,128], index: 3, kind: input, shape index: {}]
  %s4 = inlined_call_operand.hbm [shape: bf16[1,1024,128], index: 4, kind: output, shape index: {0}]
  %s5 = inlined_call_operand.hbm [shape: f32[1,1,1024], index: 5, kind: output, shape index: {1}]
  %s6 = inlined_call_operand.hbm [shape: f32[1,1,1024], index: 6, kind: output, shape index: {2}]
  %7 = xla_tuple %s4, %s5, %s6
  %s8 = sld [smem:[#allocation0]]
  $region65: #{tpu_custom_call.1} parent=0
    _
  %s10 = ssub.s32 1, %s8
  %s11 = scalar_select 0, %s10, %s8
  $region1: #{tpu_custom_call.1} parent=0
    #allocation2 [shape = 'u8[262144]{0}', space=vmem, size = 0x40000, scoped, tag = 'output window, operand 0']
    #allocation3 [shape = 's32[2]{0}', space=sflag, size = 0x8, scoped, tag = 'scoped memory for tpu_custom_call.1']
    #allocation4 [shape = 'u8[4096]{0}', space=vmem, size = 0x1000, scoped, tag = 'output window, operand 1']
    #allocation5 [shape = 's32[2]{0}', space=sflag, size = 0x8, scoped, tag = 'scoped memory for tpu_custom_call.1']
    #allocation6 [shape = 'u8[4096]{0}', space=vmem, size = 0x1000, scoped, tag = 'output window, operand 2']
    %12 = vsyncpa [#allocation3], 0
    %s13 = scalar_lea.sflag [#allocation3], 1
    %14 = vsyncpa %s13, 0
    %15 = vsyncpa [#allocation5], 0
    %s16 = scalar_lea.sflag [#allocation5], 1
    %17 = vsyncpa %s16, 0
    loop: start=0, step=1, limit=4
    $region2: #{tpu_custom_call.1} parent=1 // loop_pre_header
      _
    $region3: #{tpu_custom_call.1} parent=1 // loop_header
      %s19 = sphi 0, %s23
      %p20 = scmp.ge.s32.totalorder %s19, 4
      %s29 = sphi 0, %s31
      %s32 = sphi 0, %s29
      %s33 = sphi 0, %s32
      %s49 = sphi 0, %s33
      %s53 = sphi 0, %s53
      %s55 = sphi 0, %s53
      %s56 = sphi 0, %s55
      %s70 = sphi 0, %s56
      %s74 = sphi 0, %s74
      %s76 = sphi 0, %s74
      %s77 = sphi 0, %s76
      %s91 = sphi 0, %s77
      %s95 = sphi 0, %s95
      %s97 = sphi 0, %s95
      %s98 = sphi 0, %s97
      %s112 = sphi 0, %s98
      %s118 = sphi 0, %s120
      %s121 = sphi 0, %s118
      %s122 = sphi 0, %s121
      %s138 = sphi 0, %s122
      %s144 = sphi 0, %s146
      %s147 = sphi 0, %s144
      %s148 = sphi 0, %s147
      %s164 = sphi 0, %s148
      %s170 = sphi 0, %s172
      %s173 = sphi 0, %s170
      %s174 = sphi 0, %s173
      %s190 = sphi 0, %s174
    $region4: #{tpu_custom_call.1} parent=1 // loop_header_branch
      %22 = sbr.rel (%p20) target = $region8
    $region5: #{tpu_custom_call.1} parent=1 // loop_body
      %s24 = ssub.s32 %s19, 1
      %s25 = ssub.s32 %s19, 2
      %s26 = sadd.s32 %s19, 1
      %s27 = ssub.s32 %s19, %s26
      %p28 = scmp.eq.s32.totalorder %s27, 0
      %s30 = sadd.s32 %s29, 1
      %s31 = scalar_select %p28, %s29, %s30
      %p34 = pneg %p28
      %p35 = scmp.eq.s32.totalorder %s19, 1
      %p36 = por %p34, %p35
      %p37 = scmp.ne.s32.totalorder %s29, %s32
      %p38 = scmp.eq.s32.totalorder %s19, 0
      %p39 = por %p37, %p38
      %p40 = scmp.ne.s32.totalorder %s29, %s32
      %p41 = scmp.eq.s32.totalorder %s24, 1
      %p42 = por %p40, %p41
      %p43 = scmp.ne.s32.totalorder %s32, %s33
      %p44 = scmp.eq.s32.totalorder %s24, 0
      %p45 = por %p43, %p44
      %p46 = scmp.ne.s32.totalorder %s32, %s33
      %p47 = scmp.eq.s32.totalorder %s25, 1
      %p48 = por %p46, %p47
      %p50 = scmp.ne.s32.totalorder %s33, %s49
      %p51 = scmp.eq.s32.totalorder %s25, 0
      %p52 = por %p50, %p51
      %s54 = sadd.s32 %s53, 1
      %p57 = scmp.eq.s32.totalorder %s19, 1
      %p58 = scmp.ne.s32.totalorder %s53, %s55
      %p59 = scmp.eq.s32.totalorder %s19, 0
      %p60 = por %p58, %p59
      %p61 = scmp.ne.s32.totalorder %s53, %s55
      %p62 = scmp.eq.s32.totalorder %s24, 1
      %p63 = por %p61, %p62
      %p64 = scmp.ne.s32.totalorder %s55, %s56
      %p65 = scmp.eq.s32.totalorder %s24, 0
      %p66 = por %p64, %p65
      %p67 = scmp.ne.s32.totalorder %s55, %s56
      %p68 = scmp.eq.s32.totalorder %s25, 1
      %p69 = por %p67, %p68
      %p71 = scmp.ne.s32.totalorder %s56, %s70
      %p72 = scmp.eq.s32.totalorder %s25, 0
      %p73 = por %p71, %p72
      %s75 = sadd.s32 %s74, 1
      %p78 = scmp.eq.s32.totalorder %s19, 1
      %p79 = scmp.ne.s32.totalorder %s74, %s76
      %p80 = scmp.eq.s32.totalorder %s19, 0
      %p81 = por %p79, %p80
      %p82 = scmp.ne.s32.totalorder %s74, %s76
      %p83 = scmp.eq.s32.totalorder %s24, 1
      %p84 = por %p82, %p83
      %p85 = scmp.ne.s32.totalorder %s76, %s77
      %p86 = scmp.eq.s32.totalorder %s24, 0
      %p87 = por %p85, %p86
      %p88 = scmp.ne.s32.totalorder %s76, %s77
      %p89 = scmp.eq.s32.totalorder %s25, 1
      %p90 = por %p88, %p89
      %p92 = scmp.ne.s32.totalorder %s77, %s91
      %p93 = scmp.eq.s32.totalorder %s25, 0
      %p94 = por %p92, %p93
      %s96 = sadd.s32 %s95, 1
      %p99 = scmp.eq.s32.totalorder %s19, 1
      %p100 = scmp.ne.s32.totalorder %s95, %s97
      %p101 = scmp.eq.s32.totalorder %s19, 0
      %p102 = por %p100, %p101
      %p103 = scmp.ne.s32.totalorder %s95, %s97
      %p104 = scmp.eq.s32.totalorder %s24, 1
      %p105 = por %p103, %p104
      %p106 = scmp.ne.s32.totalorder %s97, %s98
      %p107 = scmp.eq.s32.totalorder %s24, 0
      %p108 = por %p106, %p107
      %p109 = scmp.ne.s32.totalorder %s97, %s98
      %p110 = scmp.eq.s32.totalorder %s25, 1
      %p111 = por %p109, %p110
      %p113 = scmp.ne.s32.totalorder %s98, %s112
      %p114 = scmp.eq.s32.totalorder %s25, 0
      %p115 = por %p113, %p114
      %s116 = ssub.s32 %s19, %s26
      %p117 = scmp.eq.s32.totalorder %s116, 0
      %s119 = sadd.s32 %s118, 1
      %s120 = scalar_select %p117, %s118, %s119
      %p123 = pneg %p117
      %p124 = scmp.eq.s32.totalorder %s19, 1
      %p125 = por %p123, %p124
      %p126 = scmp.ne.s32.totalorder %s118, %s121
      %p127 = scmp.eq.s32.totalorder %s19, 0
      %p128 = por %p126, %p127
      %p129 = scmp.ne.s32.totalorder %s118, %s121
      %p130 = scmp.eq.s32.totalorder %s24, 1
      %p131 = por %p129, %p130
      %p132 = scmp.ne.s32.totalorder %s121, %s122
      %p133 = scmp.eq.s32.totalorder %s24, 0
      %p134 = por %p132, %p133
      %p135 = scmp.ne.s32.totalorder %s121, %s122
      %p136 = scmp.eq.s32.totalorder %s25, 1
      %p137 = por %p135, %p136
      %p139 = scmp.ne.s32.totalorder %s122, %s138
      %p140 = scmp.eq.s32.totalorder %s25, 0
      %p141 = por %p139, %p140
      %s142 = ssub.s32 %s19, %s26
      %p143 = scmp.eq.s32.totalorder %s142, 0
      %s145 = sadd.s32 %s144, 1
      %s146 = scalar_select %p143, %s144, %s145
      %p149 = pneg %p143
      %p150 = scmp.eq.s32.totalorder %s19, 1
      %p151 = por %p149, %p150
      %p152 = scmp.ne.s32.totalorder %s144, %s147
      %p153 = scmp.eq.s32.totalorder %s19, 0
      %p154 = por %p152, %p153
      %p155 = scmp.ne.s32.totalorder %s144, %s147
      %p156 = scmp.eq.s32.totalorder %s24, 1
      %p157 = por %p155, %p156
      %p158 = scmp.ne.s32.totalorder %s147, %s148
      %p159 = scmp.eq.s32.totalorder %s24, 0
      %p160 = por %p158, %p159
      %p161 = scmp.ne.s32.totalorder %s147, %s148
      %p162 = scmp.eq.s32.totalorder %s25, 1
      %p163 = por %p161, %p162
      %p165 = scmp.ne.s32.totalorder %s148, %s164
      %p166 = scmp.eq.s32.totalorder %s25, 0
      %p167 = por %p165, %p166
      %s168 = ssub.s32 %s19, %s26
      %p169 = scmp.eq.s32.totalorder %s168, 0
      %s171 = sadd.s32 %s170, 1
      %s172 = scalar_select %p169, %s170, %s171
      %p175 = pneg %p169
      %p176 = scmp.eq.s32.totalorder %s19, 1
      %p177 = por %p175, %p176
      %p178 = scmp.ne.s32.totalorder %s170, %s173
      %p179 = scmp.eq.s32.totalorder %s19, 0
      %p180 = por %p178, %p179
      %p181 = scmp.ne.s32.totalorder %s170, %s173
      %p182 = scmp.eq.s32.totalorder %s24, 1
      %p183 = por %p181, %p182
      %p184 = scmp.ne.s32.totalorder %s173, %s174
      %p185 = scmp.eq.s32.totalorder %s24, 0
      %p186 = por %p184, %p185
      %p187 = scmp.ne.s32.totalorder %s173, %s174
      %p188 = scmp.eq.s32.totalorder %s25, 1
      %p189 = por %p187, %p188
      %p191 = scmp.ne.s32.totalorder %s174, %s190
      %p192 = scmp.eq.s32.totalorder %s25, 0
      %p193 = por %p191, %p192
      %p194 = scmp.le.s32.totalorder 1, %s19
      %p195 = scmp.lt.s32.totalorder %s19, 3
      %p196 = pnand %p194, %p195
      %p197 = pneg %p196
      // Predicated region
      $region9: #{tpu_custom_call.1} parent=5 // pred_check
        _
      $region10: #{tpu_custom_call.1} parent=5 // pred_check_branch
        %199 = sbr.rel (%p196) target = $region12
      $region11: #{tpu_custom_call.1} parent=5 // pred_region
        %s200 = ssub.s32 %s19, 1
        // Predicated region
        $region13: #{tpu_custom_call.1} parent=11 // pred_check
          %p201 = pneg %p66
        $region14: #{tpu_custom_call.1} parent=11 // pred_check_branch
          %203 = sbr.rel (%p201) target = $region16
        $region15: #{tpu_custom_call.1} parent=11 // pred_region
          _
        $region16: #{tpu_custom_call.1} parent=11 // pred_fallthru
          _
        // Predicated region
        $region17: #{tpu_custom_call.1} parent=11 // pred_check
          %p204 = pneg %p87
        $region18: #{tpu_custom_call.1} parent=11 // pred_check_branch
          %206 = sbr.rel (%p204) target = $region20
        $region19: #{tpu_custom_call.1} parent=11 // pred_region
          _
        $region20: #{tpu_custom_call.1} parent=11 // pred_fallthru
          _
        // Predicated region
        $region21: #{tpu_custom_call.1} parent=11 // pred_check
          %p207 = pneg %p108
        $region22: #{tpu_custom_call.1} parent=11 // pred_check_branch
          %209 = sbr.rel (%p207) target = $region24
        $region23: #{tpu_custom_call.1} parent=11 // pred_region
          _
        $region24: #{tpu_custom_call.1} parent=11 // pred_fallthru
          _
      $region12: #{tpu_custom_call.1} parent=5 // pred_fallthru
        _
      %p210 = scmp.lt.s32.totalorder %s19, 2
      // Predicated region
      $region25: #{tpu_custom_call.1} parent=5 // pred_check
        %p211 = pneg %p210
      $region26: #{tpu_custom_call.1} parent=5 // pred_check_branch
        %213 = sbr.rel (%p211) target = $region28
      $region27: #{tpu_custom_call.1} parent=5 // pred_region
        // Predicated region
        $region29: #{tpu_custom_call.1} parent=27 // pred_check
          %p214 = pneg %p39
        $region30: #{tpu_custom_call.1} parent=27 // pred_check_branch
          %216 = sbr.rel (%p214) target = $region32
        $region31: #{tpu_custom_call.1} parent=27 // pred_region
          %s217 = smul.u32 64, %s19
          %p218 = scmp.lt.s32.totalorder %s217, 127
          %s219 = scalar_select %p218, %s217, 127
          %s220 = smul.addr %s219, 8
          %s221 = scalar_lea.vmem %s0, %s220
          %s222 = smul.u32 64, %s19
        $region32: #{tpu_custom_call.1} parent=27 // pred_fallthru
          _
      $region28: #{tpu_custom_call.1} parent=5 // pred_fallthru
        _
      %p223 = scmp.le.s32.totalorder 1, %s19
      %p224 = scmp.lt.s32.totalorder %s19, 3
      %p225 = pnand %p223, %p224
      %p226 = pneg %p225
      // Predicated region
      $region33: #{tpu_custom_call.1} parent=5 // pred_check
        _
      $region34: #{tpu_custom_call.1} parent=5 // pred_check_branch
        %228 = sbr.rel (%p225) target = $region36
      $region35: #{tpu_custom_call.1} parent=5 // pred_region
        %s229 = ssub.s32 %s19, 1
        %s230 = smul.u32 64, %s24
        %p231 = scmp.lt.s32.totalorder %s230, 127
        %s232 = scalar_select %p231, %s230, 127
        %s233 = smul.addr %s232, 8
        %s234 = scalar_lea.vmem %s0, %s233
        %p235 = pneg %p45
        %p236 = pneg %p42
        %p237 = pneg %p66
        %p238 = pneg %p63
        %p239 = pneg %p87
        %p240 = pneg %p84
        %p241 = pneg %p108
        %p242 = pneg %p105
        %p243 = pneg %p134
        %p244 = pneg %p131
        %s245 = sand.u32 %s121, 1
        %s246 = scalar_lea.sflag [#allocation3], %s245
        %s247 = sand.u32 %s121, 1
        %s248 = smul.addr %s247, 256
        %s249 = scalar_lea.vmem [#allocation2], %s248
        %p250 = pneg %p160
        %p251 = pneg %p157
        %s252 = sand.u32 %s24, 1
        %s253 = scalar_lea.sflag [#allocation5], %s252
        %s254 = sand.u32 %s147, 1
        %s255 = smul.addr %s254, 4
        %s256 = scalar_lea.vmem [#allocation4], %s255
        %p257 = pneg %p186
        %p258 = pneg %p183
        %s259 = sand.u32 %s24, 1
        %s260 = scalar_lea.sflag [#allocation5], %s259
        %s261 = sand.u32 %s173, 1
        %s262 = smul.addr %s261, 4
        %s263 = scalar_lea.vmem [#allocation6], %s262
        %s264 = smul.u32 64, %s24
        %p265 = scmp.lt.s32.totalorder %s264, 127
        %s266 = scalar_select %p265, %s264, 127
        %s267 = smul.addr %s266, 8
        %s268 = scalar_lea.vmem %s0, %s267
        %s269 = smul.u32 64, %s24
        %s270 = smul.u32 64, %s24
        %s271 = smul.u32 4, %s24
        %s272 = smul.u32 4, %s24
        %v273 = vld [vmem:[%s268] sm:$0xff]
        %v274 = vld [vmem:[%s268 + $0x8] sm:$0xff]
        %v275 = vld [vmem:[%s268 + $0x10] sm:$0xff]
        %v276 = vld [vmem:[%s268 + $0x18] sm:$0xff]
        %v277 = vld [vmem:[%s268 + $0x20] sm:$0xff]
        %v278 = vld [vmem:[%s268 + $0x28] sm:$0xff]
        %v279 = vld [vmem:[%s268 + $0x30] sm:$0xff]
        %v280 = vld [vmem:[%s268 + $0x38] sm:$0xff]
        %v281 = vld [vmem:[%s268 + $0x40] sm:$0xff]
        %v282 = vld [vmem:[%s268 + $0x48] sm:$0xff]
        %v283 = vld [vmem:[%s268 + $0x50] sm:$0xff]
        %v284 = vld [vmem:[%s268 + $0x58] sm:$0xff]
        %v285 = vld [vmem:[%s268 + $0x60] sm:$0xff]
        %v286 = vld [vmem:[%s268 + $0x68] sm:$0xff]
        %v287 = vld [vmem:[%s268 + $0x70] sm:$0xff]
        %v288 = vld [vmem:[%s268 + $0x78] sm:$0xff]
        %v289 = vld [vmem:[%s268 + $0x80] sm:$0xff]
        %v290 = vld [vmem:[%s268 + $0x88] sm:$0xff]
        %v291 = vld [vmem:[%s268 + $0x90] sm:$0xff]
        %v292 = vld [vmem:[%s268 + $0x98] sm:$0xff]
        %v293 = vld [vmem:[%s268 + $0xa0] sm:$0xff]
        %v294 = vld [vmem:[%s268 + $0xa8] sm:$0xff]
        %v295 = vld [vmem:[%s268 + $0xb0] sm:$0xff]
        %v296 = vld [vmem:[%s268 + $0xb8] sm:$0xff]
        %v297 = vld [vmem:[%s268 + $0xc0] sm:$0xff]
        %v298 = vld [vmem:[%s268 + $0xc8] sm:$0xff]
        %v299 = vld [vmem:[%s268 + $0xd0] sm:$0xff]
        %v300 = vld [vmem:[%s268 + $0xd8] sm:$0xff]
        %v301 = vld [vmem:[%s268 + $0xe0] sm:$0xff]
        %v302 = vld [vmem:[%s268 + $0xe8] sm:$0xff]
        %v303 = vld [vmem:[%s268 + $0xf0] sm:$0xff]
        %v304 = vld [vmem:[%s268 + $0xf8] sm:$0xff]
        %v305 = vld [vmem:[%s268 + $0x100] sm:$0xff]
        %v306 = vld [vmem:[%s268 + $0x108] sm:$0xff]
        %v307 = vld [vmem:[%s268 + $0x110] sm:$0xff]
        %v308 = vld [vmem:[%s268 + $0x118] sm:$0xff]
        %v309 = vld [vmem:[%s268 + $0x120] sm:$0xff]
        %v310 = vld [vmem:[%s268 + $0x128] sm:$0xff]
        %v311 = vld [vmem:[%s268 + $0x130] sm:$0xff]
        %v312 = vld [vmem:[%s268 + $0x138] sm:$0xff]
        %v313 = vld [vmem:[%s268 + $0x140] sm:$0xff]
        %v314 = vld [vmem:[%s268 + $0x148] sm:$0xff]
        %v315 = vld [vmem:[%s268 + $0x150] sm:$0xff]
        %v316 = vld [vmem:[%s268 + $0x158] sm:$0xff]
        %v317 = vld [vmem:[%s268 + $0x160] sm:$0xff]
        %v318 = vld [vmem:[%s268 + $0x168] sm:$0xff]
        %v319 = vld [vmem:[%s268 + $0x170] sm:$0xff]
        %v320 = vld [vmem:[%s268 + $0x178] sm:$0xff]
        %v321 = vld [vmem:[%s268 + $0x180] sm:$0xff]
        %v322 = vld [vmem:[%s268 + $0x188] sm:$0xff]
        %v323 = vld [vmem:[%s268 + $0x190] sm:$0xff]
        %v324 = vld [vmem:[%s268 + $0x198] sm:$0xff]
        %v325 = vld [vmem:[%s268 + $0x1a0] sm:$0xff]
        %v326 = vld [vmem:[%s268 + $0x1a8] sm:$0xff]
        %v327 = vld [vmem:[%s268 + $0x1b0] sm:$0xff]
        %v328 = vld [vmem:[%s268 + $0x1b8] sm:$0xff]
        %v329 = vld [vmem:[%s268 + $0x1c0] sm:$0xff]
        %v330 = vld [vmem:[%s268 + $0x1c8] sm:$0xff]
        %v331 = vld [vmem:[%s268 + $0x1d0] sm:$0xff]
        %v332 = vld [vmem:[%s268 + $0x1d8] sm:$0xff]
        %v333 = vld [vmem:[%s268 + $0x1e0] sm:$0xff]
        %v334 = vld [vmem:[%s268 + $0x1e8] sm:$0xff]
        %v335 = vld [vmem:[%s268 + $0x1f0] sm:$0xff]
        %v336 = vld [vmem:[%s268 + $0x1f8] sm:$0xff]
        %v337 = vld [vmem:[%s1] sm:$0xff]
        %v338 = vld [vmem:[%s1 + $0x8] sm:$0xff]
        %vm339 = vcmask 130048
        %v341 = vsel %vm339, %v273, 0
        %v344 = vsel %vm339, %v274, 0
        %v347 = vsel %vm339, %v275, 0
        %v350 = vsel %vm339, %v276, 0
        %v353 = vsel %vm339, %v277, 0
        %v356 = vsel %vm339, %v278, 0
        %v359 = vsel %vm339, %v279, 0
        %v362 = vsel %vm339, %v280, 0
        %v365 = vsel %vm339, %v281, 0
        %v368 = vsel %vm339, %v282, 0
        %v371 = vsel %vm339, %v283, 0
        %v374 = vsel %vm339, %v284, 0
        %v377 = vsel %vm339, %v285, 0
        %v380 = vsel %vm339, %v286, 0
        %v383 = vsel %vm339, %v287, 0
        %v386 = vsel %vm339, %v288, 0
        %v389 = vsel %vm339, %v289, 0
        %v392 = vsel %vm339, %v290, 0
        %v395 = vsel %vm339, %v291, 0
        %v398 = vsel %vm339, %v292, 0
        %v401 = vsel %vm339, %v293, 0
        %v404 = vsel %vm339, %v294, 0
        %v407 = vsel %vm339, %v295, 0
        %v410 = vsel %vm339, %v296, 0
        %v413 = vsel %vm339, %v297, 0
        %v416 = vsel %vm339, %v298, 0
        %v419 = vsel %vm339, %v299, 0
        %v422 = vsel %vm339, %v300, 0
        %v425 = vsel %vm339, %v301, 0
        %v428 = vsel %vm339, %v302, 0
        %v431 = vsel %vm339, %v303, 0
        %v434 = vsel %vm339, %v304, 0
        %v437 = vsel %vm339, %v305, 0
        %v440 = vsel %vm339, %v306, 0
        %v443 = vsel %vm339, %v307, 0
        %v446 = vsel %vm339, %v308, 0
        %v449 = vsel %vm339, %v309, 0
        %v452 = vsel %vm339, %v310, 0
        %v455 = vsel %vm339, %v311, 0
        %v458 = vsel %vm339, %v312, 0
        %v461 = vsel %vm339, %v313, 0
        %v464 = vsel %vm339, %v314, 0
        %v467 = vsel %vm339, %v315, 0
        %v470 = vsel %vm339, %v316, 0
        %v473 = vsel %vm339, %v317, 0
        %v476 = vsel %vm339, %v318, 0
        %v479 = vsel %vm339, %v319, 0
        %v482 = vsel %vm339, %v320, 0
        %v485 = vsel %vm339, %v321, 0
        %v488 = vsel %vm339, %v322, 0
        %v491 = vsel %vm339, %v323, 0
        %v494 = vsel %vm339, %v324, 0
        %v497 = vsel %vm339, %v325, 0
        %v500 = vsel %vm339, %v326, 0
        %v503 = vsel %vm339, %v327, 0
        %v506 = vsel %vm339, %v328, 0
        %v509 = vsel %vm339, %v329, 0
        %v512 = vsel %vm339, %v330, 0
        %v515 = vsel %vm339, %v331, 0
        %v518 = vsel %vm339, %v332, 0
        %v521 = vsel %vm339, %v333, 0
        %v524 = vsel %vm339, %v334, 0
        %v527 = vsel %vm339, %v335, 0
        %v530 = vsel %vm339, %v336, 0
        %532 = vmatprep.subr.mxu0 0.0
        %533 = vmatpush1.msra.mxu0 0.0
        %534 = vmatprep.subr.mxu0 0.0
        %535 = vmatpush1.msra.mxu0 0.0
        %536 = vmatprep.subr.mxu0 0.0
        %537 = vmatpush1.msra.mxu0 0.0
        %538 = vmatprep.subr.mxu0 0.0
        %539 = vmatpush1.msra.mxu0 0.0
        %540 = vmatprep.subr.mxu0 0.0
        %541 = vmatpush1.msra.mxu0 0.0
        %542 = vmatprep.subr.mxu0 0.0
        %543 = vmatpush1.msra.mxu0 0.0
        %544 = vmatprep.subr.mxu0 0.0
        %545 = vmatpush1.msra.mxu0 0.0
        %546 = vmatprep.subr.mxu0 0.0
        %547 = vmatpush1.msra.mxu0 0.0
        %548 = vmatprep.subr.mxu0 0.0
        %549 = vmatpush1.msra.mxu0 0.0
        %550 = vmatprep.subr.mxu0 0.0
        %551 = vmatpush1.msra.mxu0 0.0
        %552 = vmatprep.subr.mxu0 0.0
        %553 = vmatpush1.msra.mxu0 0.0
        %554 = vmatprep.subr.mxu0 0.0
        %555 = vmatpush1.msra.mxu0 0.0
        %556 = vmatprep.subr.mxu0 0.0
        %557 = vmatpush1.msra.mxu0 0.0
        %558 = vmatprep.subr.mxu0 0.0
        %559 = vmatpush1.msra.mxu0 0.0
        %560 = vmatprep.subr.mxu0 0.0
        %561 = vmatpush1.msra.mxu0 %v338
        %562 = vmatprep.subr.mxu0 0.0
        %563 = vmatpush1.msra.mxu0 %v337
        %564 = vmatprep.subr.mxu0 0.0
        %565 = vmatpush2.msra.mxu0 0.0
        %566 = vmatprep.subr.mxu0 0.0
        %567 = vmatpush2.msra.mxu0 0.0
        %568 = vmatprep.subr.mxu0 0.0
        %569 = vmatpush2.msra.mxu0 0.0
        %570 = vmatprep.subr.mxu0 0.0
        %571 = vmatpush2.msra.mxu0 0.0
        %572 = vmatprep.subr.mxu0 0.0
        %573 = vmatpush2.msra.mxu0 0.0
        %574 = vmatprep.subr.mxu0 0.0
        %575 = vmatpush2.msra.mxu0 0.0
        %576 = vmatprep.subr.mxu0 0.0
        %577 = vmatpush2.msra.mxu0 0.0
        %578 = vmatprep.subr.mxu0 0.0
        %579 = vmatpush2.msra.mxu0 0.0
        %580 = vmatprep.subr.mxu0 0.0
        %581 = vmatpush2.msra.mxu0 0.0
        %582 = vmatprep.subr.mxu0 0.0
        %583 = vmatpush2.msra.mxu0 0.0
        %584 = vmatprep.subr.mxu0 0.0
        %585 = vmatpush2.msra.mxu0 0.0
        %586 = vmatprep.subr.mxu0 0.0
        %587 = vmatpush2.msra.mxu0 0.0
        %588 = vmatprep.subr.mxu0 0.0
        %589 = vmatpush2.msra.mxu0 0.0
        %590 = vmatprep.subr.mxu0 0.0
        %591 = vmatpush2.msra.mxu0 0.0
        %592 = vmatprep.subr.mxu0 0.0
        %593 = vmatpush2.msra.mxu0 0.0
        %594 = vmatprep.subr.mxu0 0.0
        %595 = vmatpush2.msra.mxu0 0.0
        %596 = vmatprep.mubr.f32.mxu0 0.0
        %597 = vmatmul.mubr.f32.gmra.mxu0 %v341
        %v598 = vpop.f32.mrf.mxu0
        %v599 = vadd.f32 0.0, %v598
        %v600 = vpop.f32.mrf.mxu0
        %601 = vmatprep.mubr.f32.mxu0 0.0
        %602 = vmatmul.mubr.f32.gmra.mxu0 %v344
        %v603 = vpop.f32.mrf.mxu0
        %v604 = vadd.f32 0.0, %v603
        %v605 = vpop.f32.mrf.mxu0
        %606 = vmatprep.mubr.f32.mxu0 0.0
        %607 = vmatmul.mubr.f32.gmra.mxu0 %v347
        %v608 = vpop.f32.mrf.mxu0
        %v609 = vadd.f32 0.0, %v608
        %v610 = vpop.f32.mrf.mxu0
        %611 = vmatprep.mubr.f32.mxu0 0.0
        %612 = vmatmul.mubr.f32.gmra.mxu0 %v350
        %v613 = vpop.f32.mrf.mxu0
        %v614 = vadd.f32 0.0, %v613
        %v615 = vpop.f32.mrf.mxu0
        %616 = vmatprep.mubr.f32.mxu0 0.0
        %617 = vmatmul.mubr.f32.gmra.mxu0 %v353
        %v618 = vpop.f32.mrf.mxu0
        %v619 = vadd.f32 0.0, %v618
        %v620 = vpop.f32.mrf.mxu0
        %621 = vmatprep.mubr.f32.mxu0 0.0
        %622 = vmatmul.mubr.f32.gmra.mxu0 %v356
        %v623 = vpop.f32.mrf.mxu0
        %v624 = vadd.f32 0.0, %v623
        %v625 = vpop.f32.mrf.mxu0
        %626 = vmatprep.mubr.f32.mxu0 0.0
        %627 = vmatmul.mubr.f32.gmra.mxu0 %v359
        %v628 = vpop.f32.mrf.mxu0
        %v629 = vadd.f32 0.0, %v628
        %v630 = vpop.f32.mrf.mxu0
        %631 = vmatprep.mubr.f32.mxu0 0.0
        %632 = vmatmul.mubr.f32.gmra.mxu0 %v362
        %v633 = vpop.f32.mrf.mxu0
        %v634 = vadd.f32 0.0, %v633
        %v635 = vpop.f32.mrf.mxu0
        %636 = vmatprep.mubr.f32.mxu0 0.0
        %637 = vmatmul.mubr.f32.gmra.mxu0 %v365
        %v638 = vpop.f32.mrf.mxu0
        %v639 = vadd.f32 0.0, %v638
        %v640 = vpop.f32.mrf.mxu0
        %641 = vmatprep.mubr.f32.mxu0 0.0
        %642 = vmatmul.mubr.f32.gmra.mxu0 %v368
        %v643 = vpop.f32.mrf.mxu0
        %v644 = vadd.f32 0.0, %v643
        %v645 = vpop.f32.mrf.mxu0
        %646 = vmatprep.mubr.f32.mxu0 0.0
        %647 = vmatmul.mubr.f32.gmra.mxu0 %v371
        %v648 = vpop.f32.mrf.mxu0
        %v649 = vadd.f32 0.0, %v648
        %v650 = vpop.f32.mrf.mxu0
        %651 = vmatprep.mubr.f32.mxu0 0.0
        %652 = vmatmul.mubr.f32.gmra.mxu0 %v374
        %v653 = vpop.f32.mrf.mxu0
        %v654 = vadd.f32 0.0, %v653
        %v655 = vpop.f32.mrf.mxu0
        %656 = vmatprep.mubr.f32.mxu0 0.0
        %657 = vmatmul.mubr.f32.gmra.mxu0 %v377
        %v658 = vpop.f32.mrf.mxu0
        %v659 = vadd.f32 0.0, %v658
        %v660 = vpop.f32.mrf.mxu0
        %661 = vmatprep.mubr.f32.mxu0 0.0
        %662 = vmatmul.mubr.f32.gmra.mxu0 %v380
        %v663 = vpop.f32.mrf.mxu0
        %v664 = vadd.f32 0.0, %v663
        %v665 = vpop.f32.mrf.mxu0
        %666 = vmatprep.mubr.f32.mxu0 0.0
        %667 = vmatmul.mubr.f32.gmra.mxu0 %v383
        %v668 = vpop.f32.mrf.mxu0
        %v669 = vadd.f32 0.0, %v668
        %v670 = vpop.f32.mrf.mxu0
        %671 = vmatprep.mubr.f32.mxu0 0.0
        %672 = vmatmul.mubr.f32.gmra.mxu0 %v386
        %v673 = vpop.f32.mrf.mxu0
        %v674 = vadd.f32 0.0, %v673
        %v675 = vpop.f32.mrf.mxu0
        %676 = vmatprep.mubr.f32.mxu0 0.0
        %677 = vmatmul.mubr.f32.gmra.mxu0 %v389
        %v678 = vpop.f32.mrf.mxu0
        %v679 = vadd.f32 0.0, %v678
        %v680 = vpop.f32.mrf.mxu0
        %681 = vmatprep.mubr.f32.mxu0 0.0
        %682 = vmatmul.mubr.f32.gmra.mxu0 %v392
        %v683 = vpop.f32.mrf.mxu0
        %v684 = vadd.f32 0.0, %v683
        %v685 = vpop.f32.mrf.mxu0
        %686 = vmatprep.mubr.f32.mxu0 0.0
        %687 = vmatmul.mubr.f32.gmra.mxu0 %v395
        %v688 = vpop.f32.mrf.mxu0
        %v689 = vadd.f32 0.0, %v688
        %v690 = vpop.f32.mrf.mxu0
        %691 = vmatprep.mubr.f32.mxu0 0.0
        %692 = vmatmul.mubr.f32.gmra.mxu0 %v398
        %v693 = vpop.f32.mrf.mxu0
        %v694 = vadd.f32 0.0, %v693
        %v695 = vpop.f32.mrf.mxu0
        %696 = vmatprep.mubr.f32.mxu0 0.0
        %697 = vmatmul.mubr.f32.gmra.mxu0 %v401
        %v698 = vpop.f32.mrf.mxu0
        %v699 = vadd.f32 0.0, %v698
        %v700 = vpop.f32.mrf.mxu0
        %701 = vmatprep.mubr.f32.mxu0 0.0
        %702 = vmatmul.mubr.f32.gmra.mxu0 %v404
        %v703 = vpop.f32.mrf.mxu0
        %v704 = vadd.f32 0.0, %v703
        %v705 = vpop.f32.mrf.mxu0
        %706 = vmatprep.mubr.f32.mxu0 0.0
        %707 = vmatmul.mubr.f32.gmra.mxu0 %v407
        %v708 = vpop.f32.mrf.mxu0
        %v709 = vadd.f32 0.0, %v708
        %v710 = vpop.f32.mrf.mxu0
        %711 = vmatprep.mubr.f32.mxu0 0.0
        %712 = vmatmul.mubr.f32.gmra.mxu0 %v410
        %v713 = vpop.f32.mrf.mxu0
        %v714 = vadd.f32 0.0, %v713
        %v715 = vpop.f32.mrf.mxu0
        %716 = vmatprep.mubr.f32.mxu0 0.0
        %717 = vmatmul.mubr.f32.gmra.mxu0 %v413
        %v718 = vpop.f32.mrf.mxu0
        %v719 = vadd.f32 0.0, %v718
        %v720 = vpop.f32.mrf.mxu0
        %721 = vmatprep.mubr.f32.mxu0 0.0
        %722 = vmatmul.mubr.f32.gmra.mxu0 %v416
        %v723 = vpop.f32.mrf.mxu0
        %v724 = vadd.f32 0.0, %v723
        %v725 = vpop.f32.mrf.mxu0
        %726 = vmatprep.mubr.f32.mxu0 0.0
        %727 = vmatmul.mubr.f32.gmra.mxu0 %v419
        %v728 = vpop.f32.mrf.mxu0
        %v729 = vadd.f32 0.0, %v728
        %v730 = vpop.f32.mrf.mxu0
        %731 = vmatprep.mubr.f32.mxu0 0.0
        %732 = vmatmul.mubr.f32.gmra.mxu0 %v422
        %v733 = vpop.f32.mrf.mxu0
        %v734 = vadd.f32 0.0, %v733
        %v735 = vpop.f32.mrf.mxu0
        %736 = vmatprep.mubr.f32.mxu0 0.0
        %737 = vmatmul.mubr.f32.gmra.mxu0 %v425
        %v738 = vpop.f32.mrf.mxu0
        %v739 = vadd.f32 0.0, %v738
        %v740 = vpop.f32.mrf.mxu0
        %741 = vmatprep.mubr.f32.mxu0 0.0
        %742 = vmatmul.mubr.f32.gmra.mxu0 %v428
        %v743 = vpop.f32.mrf.mxu0
        %v744 = vadd.f32 0.0, %v743
        %v745 = vpop.f32.mrf.mxu0
        %746 = vmatprep.mubr.f32.mxu0 0.0
        %747 = vmatmul.mubr.f32.gmra.mxu0 %v431
        %v748 = vpop.f32.mrf.mxu0
        %v749 = vadd.f32 0.0, %v748
        %v750 = vpop.f32.mrf.mxu0
        %751 = vmatprep.mubr.f32.mxu0 0.0
        %752 = vmatmul.mubr.f32.gmra.mxu0 %v434
        %v753 = vpop.f32.mrf.mxu0
        %v754 = vadd.f32 0.0, %v753
        %v755 = vpop.f32.mrf.mxu0
        %756 = vmatprep.mubr.f32.mxu0 0.0
        %757 = vmatmul.mubr.f32.gmra.mxu0 %v437
        %v758 = vpop.f32.mrf.mxu0
        %v759 = vadd.f32 0.0, %v758
        %v760 = vpop.f32.mrf.mxu0
        %761 = vmatprep.mubr.f32.mxu0 0.0
        %762 = vmatmul.mubr.f32.gmra.mxu0 %v440
        %v763 = vpop.f32.mrf.mxu0
        %v764 = vadd.f32 0.0, %v763
        %v765 = vpop.f32.mrf.mxu0
        %766 = vmatprep.mubr.f32.mxu0 0.0
        %767 = vmatmul.mubr.f32.gmra.mxu0 %v443
        %v768 = vpop.f32.mrf.mxu0
        %v769 = vadd.f32 0.0, %v768
        %v770 = vpop.f32.mrf.mxu0
        %771 = vmatprep.mubr.f32.mxu0 0.0
        %772 = vmatmul.mubr.f32.gmra.mxu0 %v446
        %v773 = vpop.f32.mrf.mxu0
        %v774 = vadd.f32 0.0, %v773
        %v775 = vpop.f32.mrf.mxu0
        %776 = vmatprep.mubr.f32.mxu0 0.0
        %777 = vmatmul.mubr.f32.gmra.mxu0 %v449
        %v778 = vpop.f32.mrf.mxu0
        %v779 = vadd.f32 0.0, %v778
        %v780 = vpop.f32.mrf.mxu0
        %781 = vmatprep.mubr.f32.mxu0 0.0
        %782 = vmatmul.mubr.f32.gmra.mxu0 %v452
        %v783 = vpop.f32.mrf.mxu0
        %v784 = vadd.f32 0.0, %v783
        %v785 = vpop.f32.mrf.mxu0
        %786 = vmatprep.mubr.f32.mxu0 0.0
        %787 = vmatmul.mubr.f32.gmra.mxu0 %v455
        %v788 = vpop.f32.mrf.mxu0
        %v789 = vadd.f32 0.0, %v788
        %v790 = vpop.f32.mrf.mxu0
        %791 = vmatprep.mubr.f32.mxu0 0.0
        %792 = vmatmul.mubr.f32.gmra.mxu0 %v458
        %v793 = vpop.f32.mrf.mxu0
        %v794 = vadd.f32 0.0, %v793
        %v795 = vpop.f32.mrf.mxu0
        %796 = vmatprep.mubr.f32.mxu0 0.0
        %797 = vmatmul.mubr.f32.gmra.mxu0 %v461
        %v798 = vpop.f32.mrf.mxu0
        %v799 = vadd.f32 0.0, %v798
        %v800 = vpop.f32.mrf.mxu0
        %801 = vmatprep.mubr.f32.mxu0 0.0
        %802 = vmatmul.mubr.f32.gmra.mxu0 %v464
        %v803 = vpop.f32.mrf.mxu0
        %v804 = vadd.f32 0.0, %v803
        %v805 = vpop.f32.mrf.mxu0
        %806 = vmatprep.mubr.f32.mxu0 0.0
        %807 = vmatmul.mubr.f32.gmra.mxu0 %v467
        %v808 = vpop.f32.mrf.mxu0
        %v809 = vadd.f32 0.0, %v808
        %v810 = vpop.f32.mrf.mxu0
        %811 = vmatprep.mubr.f32.mxu0 0.0
        %812 = vmatmul.mubr.f32.gmra.mxu0 %v470
        %v813 = vpop.f32.mrf.mxu0
        %v814 = vadd.f32 0.0, %v813
        %v815 = vpop.f32.mrf.mxu0
        %816 = vmatprep.mubr.f32.mxu0 0.0
        %817 = vmatmul.mubr.f32.gmra.mxu0 %v473
        %v818 = vpop.f32.mrf.mxu0
        %v819 = vadd.f32 0.0, %v818
        %v820 = vpop.f32.mrf.mxu0
        %821 = vmatprep.mubr.f32.mxu0 0.0
        %822 = vmatmul.mubr.f32.gmra.mxu0 %v476
        %v823 = vpop.f32.mrf.mxu0
        %v824 = vadd.f32 0.0, %v823
        %v825 = vpop.f32.mrf.mxu0
        %826 = vmatprep.mubr.f32.mxu0 0.0
        %827 = vmatmul.mubr.f32.gmra.mxu0 %v479
        %v828 = vpop.f32.mrf.mxu0
        %v829 = vadd.f32 0.0, %v828
        %v830 = vpop.f32.mrf.mxu0
        %831 = vmatprep.mubr.f32.mxu0 0.0
        %832 = vmatmul.mubr.f32.gmra.mxu0 %v482
        %v833 = vpop.f32.mrf.mxu0
        %v834 = vadd.f32 0.0, %v833
        %v835 = vpop.f32.mrf.mxu0
        %836 = vmatprep.mubr.f32.mxu0 0.0
        %837 = vmatmul.mubr.f32.gmra.mxu0 %v485
        %v838 = vpop.f32.mrf.mxu0
        %v839 = vadd.f32 0.0, %v838
        %v840 = vpop.f32.mrf.mxu0
        %841 = vmatprep.mubr.f32.mxu0 0.0
        %842 = vmatmul.mubr.f32.gmra.mxu0 %v488
        %v843 = vpop.f32.mrf.mxu0
        %v844 = vadd.f32 0.0, %v843
        %v845 = vpop.f32.mrf.mxu0
        %846 = vmatprep.mubr.f32.mxu0 0.0
        %847 = vmatmul.mubr.f32.gmra.mxu0 %v491
        %v848 = vpop.f32.mrf.mxu0
        %v849 = vadd.f32 0.0, %v848
        %v850 = vpop.f32.mrf.mxu0
        %851 = vmatprep.mubr.f32.mxu0 0.0
        %852 = vmatmul.mubr.f32.gmra.mxu0 %v494
        %v853 = vpop.f32.mrf.mxu0
        %v854 = vadd.f32 0.0, %v853
        %v855 = vpop.f32.mrf.mxu0
        %856 = vmatprep.mubr.f32.mxu0 0.0
        %857 = vmatmul.mubr.f32.gmra.mxu0 %v497
        %v858 = vpop.f32.mrf.mxu0
        %v859 = vadd.f32 0.0, %v858
        %v860 = vpop.f32.mrf.mxu0
        %861 = vmatprep.mubr.f32.mxu0 0.0
        %862 = vmatmul.mubr.f32.gmra.mxu0 %v500
        %v863 = vpop.f32.mrf.mxu0
        %v864 = vadd.f32 0.0, %v863
        %v865 = vpop.f32.mrf.mxu0
        %866 = vmatprep.mubr.f32.mxu0 0.0
        %867 = vmatmul.mubr.f32.gmra.mxu0 %v503
        %v868 = vpop.f32.mrf.mxu0
        %v869 = vadd.f32 0.0, %v868
        %v870 = vpop.f32.mrf.mxu0
        %871 = vmatprep.mubr.f32.mxu0 0.0
        %872 = vmatmul.mubr.f32.gmra.mxu0 %v506
        %v873 = vpop.f32.mrf.mxu0
        %v874 = vadd.f32 0.0, %v873
        %v875 = vpop.f32.mrf.mxu0
        %876 = vmatprep.mubr.f32.mxu0 0.0
        %877 = vmatmul.mubr.f32.gmra.mxu0 %v509
        %v878 = vpop.f32.mrf.mxu0
        %v879 = vadd.f32 0.0, %v878
        %v880 = vpop.f32.mrf.mxu0
        %881 = vmatprep.mubr.f32.mxu0 0.0
        %882 = vmatmul.mubr.f32.gmra.mxu0 %v512
        %v883 = vpop.f32.mrf.mxu0
        %v884 = vadd.f32 0.0, %v883
        %v885 = vpop.f32.mrf.mxu0
        %886 = vmatprep.mubr.f32.mxu0 0.0
        %887 = vmatmul.mubr.f32.gmra.mxu0 %v515
        %v888 = vpop.f32.mrf.mxu0
        %v889 = vadd.f32 0.0, %v888
        %v890 = vpop.f32.mrf.mxu0
        %891 = vmatprep.mubr.f32.mxu0 0.0
        %892 = vmatmul.mubr.f32.gmra.mxu0 %v518
        %v893 = vpop.f32.mrf.mxu0
        %v894 = vadd.f32 0.0, %v893
        %v895 = vpop.f32.mrf.mxu0
        %896 = vmatprep.mubr.f32.mxu0 0.0
        %897 = vmatmul.mubr.f32.gmra.mxu0 %v521
        %v898 = vpop.f32.mrf.mxu0
        %v899 = vadd.f32 0.0, %v898
        %v900 = vpop.f32.mrf.mxu0
        %901 = vmatprep.mubr.f32.mxu0 0.0
        %902 = vmatmul.mubr.f32.gmra.mxu0 %v524
        %v903 = vpop.f32.mrf.mxu0
        %v904 = vadd.f32 0.0, %v903
        %v905 = vpop.f32.mrf.mxu0
        %906 = vmatprep.mubr.f32.mxu0 0.0
        %907 = vmatmul.mubr.f32.gmra.mxu0 %v527
        %v908 = vpop.f32.mrf.mxu0
        %v909 = vadd.f32 0.0, %v908
        %v910 = vpop.f32.mrf.mxu0
        %911 = vmatprep.mubr.f32.mxu0 0.0
        %912 = vmatmul.mubr.f32.gmra.mxu0 %v530
        %v913 = vpop.f32.mrf.mxu0
        %v914 = vadd.f32 0.0, %v913
        %v915 = vpop.f32.mrf.mxu0
        %916 = vdwg.mxu0
        %v917 = vpack.c.bf16 %v604, %v599
        %v918 = vpack.c.bf16 %v614, %v609
        %v919 = vpack.c.bf16 %v624, %v619
        %v920 = vpack.c.bf16 %v634, %v629
        %v921 = vpack.c.bf16 %v644, %v639
        %v922 = vpack.c.bf16 %v654, %v649
        %v923 = vpack.c.bf16 %v664, %v659
        %v924 = vpack.c.bf16 %v674, %v669
        %v925 = vpack.c.bf16 %v684, %v679
        %v926 = vpack.c.bf16 %v694, %v689
        %v927 = vpack.c.bf16 %v704, %v699
        %v928 = vpack.c.bf16 %v714, %v709
        %v929 = vpack.c.bf16 %v724, %v719
        %v930 = vpack.c.bf16 %v734, %v729
        %v931 = vpack.c.bf16 %v744, %v739
        %v932 = vpack.c.bf16 %v754, %v749
        %v933 = vpack.c.bf16 %v764, %v759
        %v934 = vpack.c.bf16 %v774, %v769
        %v935 = vpack.c.bf16 %v784, %v779
        %v936 = vpack.c.bf16 %v794, %v789
        %v937 = vpack.c.bf16 %v804, %v799
        %v938 = vpack.c.bf16 %v814, %v809
        %v939 = vpack.c.bf16 %v824, %v819
        %v940 = vpack.c.bf16 %v834, %v829
        %v941 = vpack.c.bf16 %v844, %v839
        %v942 = vpack.c.bf16 %v854, %v849
        %v943 = vpack.c.bf16 %v864, %v859
        %v944 = vpack.c.bf16 %v874, %v869
        %v945 = vpack.c.bf16 %v884, %v879
        %v946 = vpack.c.bf16 %v894, %v889
        %v947 = vpack.c.bf16 %v904, %v899
        %v948 = vpack.c.bf16 %v914, %v909
        %v981 = vunpack.c.l.b16 %v917
        %v982 = vunpack.c.h.b16 %v917
        %v983 = vunpack.c.l.b16 %v918
        %v984 = vunpack.c.h.b16 %v918
        %v985 = vunpack.c.l.b16 %v919
        %v986 = vunpack.c.h.b16 %v919
        %v987 = vunpack.c.l.b16 %v920
        %v988 = vunpack.c.h.b16 %v920
        %v989 = vunpack.c.l.b16 %v921
        %v990 = vunpack.c.h.b16 %v921
        %v991 = vunpack.c.l.b16 %v922
        %v992 = vunpack.c.h.b16 %v922
        %v993 = vunpack.c.l.b16 %v923
        %v994 = vunpack.c.h.b16 %v923
        %v995 = vunpack.c.l.b16 %v924
        %v996 = vunpack.c.h.b16 %v924
        %v997 = vunpack.c.l.b16 %v925
        %v998 = vunpack.c.h.b16 %v925
        %v999 = vunpack.c.l.b16 %v926
        %v1000 = vunpack.c.h.b16 %v926
        %v1001 = vunpack.c.l.b16 %v927
        %v1002 = vunpack.c.h.b16 %v927
        %v1003 = vunpack.c.l.b16 %v928
        %v1004 = vunpack.c.h.b16 %v928
        %v1005 = vunpack.c.l.b16 %v929
        %v1006 = vunpack.c.h.b16 %v929
        %v1007 = vunpack.c.l.b16 %v930
        %v1008 = vunpack.c.h.b16 %v930
        %v1009 = vunpack.c.l.b16 %v931
        %v1010 = vunpack.c.h.b16 %v931
        %v1011 = vunpack.c.l.b16 %v932
        %v1012 = vunpack.c.h.b16 %v932
        %v1013 = vunpack.c.l.b16 %v933
        %v1014 = vunpack.c.h.b16 %v933
        %v1015 = vunpack.c.l.b16 %v934
        %v1016 = vunpack.c.h.b16 %v934
        %v1017 = vunpack.c.l.b16 %v935
        %v1018 = vunpack.c.h.b16 %v935
        %v1019 = vunpack.c.l.b16 %v936
        %v1020 = vunpack.c.h.b16 %v936
        %v1021 = vunpack.c.l.b16 %v937
        %v1022 = vunpack.c.h.b16 %v937
        %v1023 = vunpack.c.l.b16 %v938
        %v1024 = vunpack.c.h.b16 %v938
        %v1025 = vunpack.c.l.b16 %v939
        %v1026 = vunpack.c.h.b16 %v939
        %v1027 = vunpack.c.l.b16 %v940
        %v1028 = vunpack.c.h.b16 %v940
        %v1029 = vunpack.c.l.b16 %v941
        %v1030 = vunpack.c.h.b16 %v941
        %v1031 = vunpack.c.l.b16 %v942
        %v1032 = vunpack.c.h.b16 %v942
        %v1033 = vunpack.c.l.b16 %v943
        %v1034 = vunpack.c.h.b16 %v943
        %v1035 = vunpack.c.l.b16 %v944
        %v1036 = vunpack.c.h.b16 %v944
        %v1037 = vunpack.c.l.b16 %v945
        %v1038 = vunpack.c.h.b16 %v945
        %v1039 = vunpack.c.l.b16 %v946
        %v1040 = vunpack.c.h.b16 %v946
        %v1041 = vunpack.c.l.b16 %v947
        %v1042 = vunpack.c.h.b16 %v947
        %v1043 = vunpack.c.l.b16 %v948
        %v1044 = vunpack.c.h.b16 %v948
        %v1045 = vpack.c.b16 %v981, %v981
        %v1046 = vpack.c.b16 %v982, %v982
        %v1047 = vpack.c.b16 %v983, %v983
        %v1048 = vpack.c.b16 %v984, %v984
        %v1049 = vpack.c.b16 %v985, %v985
        %v1050 = vpack.c.b16 %v986, %v986
        %v1051 = vpack.c.b16 %v987, %v987
        %v1052 = vpack.c.b16 %v988, %v988
        %v1053 = vpack.c.b16 %v989, %v989
        %v1054 = vpack.c.b16 %v990, %v990
        %v1055 = vpack.c.b16 %v991, %v991
        %v1056 = vpack.c.b16 %v992, %v992
        %v1057 = vpack.c.b16 %v993, %v993
        %v1058 = vpack.c.b16 %v994, %v994
        %v1059 = vpack.c.b16 %v995, %v995
        %v1060 = vpack.c.b16 %v996, %v996
        %v1061 = vpack.c.b16 %v997, %v997
        %v1062 = vpack.c.b16 %v998, %v998
        %v1063 = vpack.c.b16 %v999, %v999
        %v1064 = vpack.c.b16 %v1000, %v1000
        %v1065 = vpack.c.b16 %v1001, %v1001
        %v1066 = vpack.c.b16 %v1002, %v1002
        %v1067 = vpack.c.b16 %v1003, %v1003
        %v1068 = vpack.c.b16 %v1004, %v1004
        %v1069 = vpack.c.b16 %v1005, %v1005
        %v1070 = vpack.c.b16 %v1006, %v1006
        %v1071 = vpack.c.b16 %v1007, %v1007
        %v1072 = vpack.c.b16 %v1008, %v1008
        %v1073 = vpack.c.b16 %v1009, %v1009
        %v1074 = vpack.c.b16 %v1010, %v1010
        %v1075 = vpack.c.b16 %v1011, %v1011
        %v1076 = vpack.c.b16 %v1012, %v1012
        %v1077 = vpack.c.b16 %v1013, %v1013
        %v1078 = vpack.c.b16 %v1014, %v1014
        %v1079 = vpack.c.b16 %v1015, %v1015
        %v1080 = vpack.c.b16 %v1016, %v1016
        %v1081 = vpack.c.b16 %v1017, %v1017
        %v1082 = vpack.c.b16 %v1018, %v1018
        %v1083 = vpack.c.b16 %v1019, %v1019
        %v1084 = vpack.c.b16 %v1020, %v1020
        %v1085 = vpack.c.b16 %v1021, %v1021
        %v1086 = vpack.c.b16 %v1022, %v1022
        %v1087 = vpack.c.b16 %v1023, %v1023
        %v1088 = vpack.c.b16 %v1024, %v1024
        %v1089 = vpack.c.b16 %v1025, %v1025
        %v1090 = vpack.c.b16 %v1026, %v1026
        %v1091 = vpack.c.b16 %v1027, %v1027
        %v1092 = vpack.c.b16 %v1028, %v1028
        %v1093 = vpack.c.b16 %v1029, %v1029
        %v1094 = vpack.c.b16 %v1030, %v1030
        %v1095 = vpack.c.b16 %v1031, %v1031
        %v1096 = vpack.c.b16 %v1032, %v1032
        %v1097 = vpack.c.b16 %v1033, %v1033
        %v1098 = vpack.c.b16 %v1034, %v1034
        %v1099 = vpack.c.b16 %v1035, %v1035
        %v1100 = vpack.c.b16 %v1036, %v1036
        %v1101 = vpack.c.b16 %v1037, %v1037
        %v1102 = vpack.c.b16 %v1038, %v1038
        %v1103 = vpack.c.b16 %v1039, %v1039
        %v1104 = vpack.c.b16 %v1040, %v1040
        %v1105 = vpack.c.b16 %v1041, %v1041
        %v1106 = vpack.c.b16 %v1042, %v1042
        %v1107 = vpack.c.b16 %v1043, %v1043
        %v1108 = vpack.c.b16 %v1044, %v1044
        %1173 = vst [vmem:[%s249] sm:$0xf] %v1045
        %1174 = vst [vmem:[%s249 + $0x4] sm:$0xf] %v1046
        %1175 = vst [vmem:[%s249 + $0x8] sm:$0xf] %v1047
        %1176 = vst [vmem:[%s249 + $0xc] sm:$0xf] %v1048
        %1177 = vst [vmem:[%s249 + $0x10] sm:$0xf] %v1049
        %1178 = vst [vmem:[%s249 + $0x14] sm:$0xf] %v1050
        %1179 = vst [vmem:[%s249 + $0x18] sm:$0xf] %v1051
        %1180 = vst [vmem:[%s249 + $0x1c] sm:$0xf] %v1052
        %1181 = vst [vmem:[%s249 + $0x20] sm:$0xf] %v1053
        %1182 = vst [vmem:[%s249 + $0x24] sm:$0xf] %v1054
        %1183 = vst [vmem:[%s249 + $0x28] sm:$0xf] %v1055
        %1184 = vst [vmem:[%s249 + $0x2c] sm:$0xf] %v1056
        %1185 = vst [vmem:[%s249 + $0x30] sm:$0xf] %v1057
        %1186 = vst [vmem:[%s249 + $0x34] sm:$0xf] %v1058
        %1187 = vst [vmem:[%s249 + $0x38] sm:$0xf] %v1059
        %1188 = vst [vmem:[%s249 + $0x3c] sm:$0xf] %v1060
        %1189 = vst [vmem:[%s249 + $0x40] sm:$0xf] %v1061
        %1190 = vst [vmem:[%s249 + $0x44] sm:$0xf] %v1062
        %1191 = vst [vmem:[%s249 + $0x48] sm:$0xf] %v1063
        %1192 = vst [vmem:[%s249 + $0x4c] sm:$0xf] %v1064
        %1193 = vst [vmem:[%s249 + $0x50] sm:$0xf] %v1065
        %1194 = vst [vmem:[%s249 + $0x54] sm:$0xf] %v1066
        %1195 = vst [vmem:[%s249 + $0x58] sm:$0xf] %v1067
        %1196 = vst [vmem:[%s249 + $0x5c] sm:$0xf] %v1068
        %1197 = vst [vmem:[%s249 + $0x60] sm:$0xf] %v1069
        %1198 = vst [vmem:[%s249 + $0x64] sm:$0xf] %v1070
        %1199 = vst [vmem:[%s249 + $0x68] sm:$0xf] %v1071
        %1200 = vst [vmem:[%s249 + $0x6c] sm:$0xf] %v1072
        %1201 = vst [vmem:[%s249 + $0x70] sm:$0xf] %v1073
        %1202 = vst [vmem:[%s249 + $0x74] sm:$0xf] %v1074
        %1203 = vst [vmem:[%s249 + $0x78] sm:$0xf] %v1075
        %1204 = vst [vmem:[%s249 + $0x7c] sm:$0xf] %v1076
        %1205 = vst [vmem:[%s249 + $0x80] sm:$0xf] %v1077
        %1206 = vst [vmem:[%s249 + $0x84] sm:$0xf] %v1078
        %1207 = vst [vmem:[%s249 + $0x88] sm:$0xf] %v1079
        %1208 = vst [vmem:[%s249 + $0x8c] sm:$0xf] %v1080
        %1209 = vst [vmem:[%s249 + $0x90] sm:$0xf] %v1081
        %1210 = vst [vmem:[%s249 + $0x94] sm:$0xf] %v1082
        %1211 = vst [vmem:[%s249 + $0x98] sm:$0xf] %v1083
        %1212 = vst [vmem:[%s249 + $0x9c] sm:$0xf] %v1084
        %1213 = vst [vmem:[%s249 + $0xa0] sm:$0xf] %v1085
        %1214 = vst [vmem:[%s249 + $0xa4] sm:$0xf] %v1086
        %1215 = vst [vmem:[%s249 + $0xa8] sm:$0xf] %v1087
        %1216 = vst [vmem:[%s249 + $0xac] sm:$0xf] %v1088
        %1217 = vst [vmem:[%s249 + $0xb0] sm:$0xf] %v1089
        %1218 = vst [vmem:[%s249 + $0xb4] sm:$0xf] %v1090
        %1219 = vst [vmem:[%s249 + $0xb8] sm:$0xf] %v1091
        %1220 = vst [vmem:[%s249 + $0xbc] sm:$0xf] %v1092
        %1221 = vst [vmem:[%s249 + $0xc0] sm:$0xf] %v1093
        %1222 = vst [vmem:[%s249 + $0xc4] sm:$0xf] %v1094
        %1223 = vst [vmem:[%s249 + $0xc8] sm:$0xf] %v1095
        %1224 = vst [vmem:[%s249 + $0xcc] sm:$0xf] %v1096
        %1225 = vst [vmem:[%s249 + $0xd0] sm:$0xf] %v1097
        %1226 = vst [vmem:[%s249 + $0xd4] sm:$0xf] %v1098
        %1227 = vst [vmem:[%s249 + $0xd8] sm:$0xf] %v1099
        %1228 = vst [vmem:[%s249 + $0xdc] sm:$0xf] %v1100
        %1229 = vst [vmem:[%s249 + $0xe0] sm:$0xf] %v1101
        %1230 = vst [vmem:[%s249 + $0xe4] sm:$0xf] %v1102
        %1231 = vst [vmem:[%s249 + $0xe8] sm:$0xf] %v1103
        %1232 = vst [vmem:[%s249 + $0xec] sm:$0xf] %v1104
        %1233 = vst [vmem:[%s249 + $0xf0] sm:$0xf] %v1105
        %1234 = vst [vmem:[%s249 + $0xf4] sm:$0xf] %v1106
        %1235 = vst [vmem:[%s249 + $0xf8] sm:$0xf] %v1107
        %1236 = vst [vmem:[%s249 + $0xfc] sm:$0xf] %v1108
        %v1237 = vld [vmem:[%s2] sm:$0x1]
        %v1239 = vlaneseq
        %v1240 = vshrl.u32 %v1239, 7
        %v1241 = vsub.s32 0, %v1240
        %v1242 = vrot.slane %v1237, %v1241
        %v1244 = vmul.f32 %v599, %v1242
        %v1245 = vmul.f32 %v604, %v1242
        %v1246 = vmul.f32 %v609, %v1242
        %v1247 = vmul.f32 %v614, %v1242
        %v1248 = vmul.f32 %v619, %v1242
        %v1249 = vmul.f32 %v624, %v1242
        %v1250 = vmul.f32 %v629, %v1242
        %v1251 = vmul.f32 %v634, %v1242
        %v1252 = vmul.f32 %v639, %v1242
        %v1253 = vmul.f32 %v644, %v1242
        %v1254 = vmul.f32 %v649, %v1242
        %v1255 = vmul.f32 %v654, %v1242
        %v1256 = vmul.f32 %v659, %v1242
        %v1257 = vmul.f32 %v664, %v1242
        %v1258 = vmul.f32 %v669, %v1242
        %v1259 = vmul.f32 %v674, %v1242
        %v1260 = vmul.f32 %v679, %v1242
        %v1261 = vmul.f32 %v684, %v1242
        %v1262 = vmul.f32 %v689, %v1242
        %v1263 = vmul.f32 %v694, %v1242
        %v1264 = vmul.f32 %v699, %v1242
        %v1265 = vmul.f32 %v704, %v1242
        %v1266 = vmul.f32 %v709, %v1242
        %v1267 = vmul.f32 %v714, %v1242
        %v1268 = vmul.f32 %v719, %v1242
        %v1269 = vmul.f32 %v724, %v1242
        %v1270 = vmul.f32 %v729, %v1242
        %v1271 = vmul.f32 %v734, %v1242
        %v1272 = vmul.f32 %v739, %v1242
        %v1273 = vmul.f32 %v744, %v1242
        %v1274 = vmul.f32 %v749, %v1242
        %v1275 = vmul.f32 %v754, %v1242
        %v1276 = vmul.f32 %v759, %v1242
        %v1277 = vmul.f32 %v764, %v1242
        %v1278 = vmul.f32 %v769, %v1242
        %v1279 = vmul.f32 %v774, %v1242
        %v1280 = vmul.f32 %v779, %v1242
        %v1281 = vmul.f32 %v784, %v1242
        %v1282 = vmul.f32 %v789, %v1242
        %v1283 = vmul.f32 %v794, %v1242
        %v1284 = vmul.f32 %v799, %v1242
        %v1285 = vmul.f32 %v804, %v1242
        %v1286 = vmul.f32 %v809, %v1242
        %v1287 = vmul.f32 %v814, %v1242
        %v1288 = vmul.f32 %v819, %v1242
        %v1289 = vmul.f32 %v824, %v1242
        %v1290 = vmul.f32 %v829, %v1242
        %v1291 = vmul.f32 %v834, %v1242
        %v1292 = vmul.f32 %v839, %v1242
        %v1293 = vmul.f32 %v844, %v1242
        %v1294 = vmul.f32 %v849, %v1242
        %v1295 = vmul.f32 %v854, %v1242
        %v1296 = vmul.f32 %v859, %v1242
        %v1297 = vmul.f32 %v864, %v1242
        %v1298 = vmul.f32 %v869, %v1242
        %v1299 = vmul.f32 %v874, %v1242
        %v1300 = vmul.f32 %v879, %v1242
        %v1301 = vmul.f32 %v884, %v1242
        %v1302 = vmul.f32 %v889, %v1242
        %v1303 = vmul.f32 %v894, %v1242
        %v1304 = vmul.f32 %v899, %v1242
        %v1305 = vmul.f32 %v904, %v1242
        %v1306 = vmul.f32 %v909, %v1242
        %v1307 = vmul.f32 %v914, %v1242
        %1308 = vadd.xlane.f32.xlu0 %v1244
        %v1309 = vpop.xlane.xlu0 %1308
        %1310 = vadd.xlane.f32.xlu0 %v1245
        %v1311 = vpop.xlane.xlu0 %1310
        %1312 = vadd.xlane.f32.xlu0 %v1246
        %v1313 = vpop.xlane.xlu0 %1312
        %1314 = vadd.xlane.f32.xlu0 %v1247
        %v1315 = vpop.xlane.xlu0 %1314
        %1316 = vadd.xlane.f32.xlu0 %v1248
        %v1317 = vpop.xlane.xlu0 %1316
        %1318 = vadd.xlane.f32.xlu0 %v1249
        %v1319 = vpop.xlane.xlu0 %1318
        %1320 = vadd.xlane.f32.xlu0 %v1250
        %v1321 = vpop.xlane.xlu0 %1320
        %1322 = vadd.xlane.f32.xlu0 %v1251
        %v1323 = vpop.xlane.xlu0 %1322
        %1324 = vadd.xlane.f32.xlu0 %v1252
        %v1325 = vpop.xlane.xlu0 %1324
        %1326 = vadd.xlane.f32.xlu0 %v1253
        %v1327 = vpop.xlane.xlu0 %1326
        %1328 = vadd.xlane.f32.xlu0 %v1254
        %v1329 = vpop.xlane.xlu0 %1328
        %1330 = vadd.xlane.f32.xlu0 %v1255
        %v1331 = vpop.xlane.xlu0 %1330
        %1332 = vadd.xlane.f32.xlu0 %v1256
        %v1333 = vpop.xlane.xlu0 %1332
        %1334 = vadd.xlane.f32.xlu0 %v1257
        %v1335 = vpop.xlane.xlu0 %1334
        %1336 = vadd.xlane.f32.xlu0 %v1258
        %v1337 = vpop.xlane.xlu0 %1336
        %1338 = vadd.xlane.f32.xlu0 %v1259
        %v1339 = vpop.xlane.xlu0 %1338
        %1340 = vadd.xlane.f32.xlu0 %v1260
        %v1341 = vpop.xlane.xlu0 %1340
        %1342 = vadd.xlane.f32.xlu0 %v1261
        %v1343 = vpop.xlane.xlu0 %1342
        %1344 = vadd.xlane.f32.xlu0 %v1262
        %v1345 = vpop.xlane.xlu0 %1344
        %1346 = vadd.xlane.f32.xlu0 %v1263
        %v1347 = vpop.xlane.xlu0 %1346
        %1348 = vadd.xlane.f32.xlu0 %v1264
        %v1349 = vpop.xlane.xlu0 %1348
        %1350 = vadd.xlane.f32.xlu0 %v1265
        %v1351 = vpop.xlane.xlu0 %1350
        %1352 = vadd.xlane.f32.xlu0 %v1266
        %v1353 = vpop.xlane.xlu0 %1352
        %1354 = vadd.xlane.f32.xlu0 %v1267
        %v1355 = vpop.xlane.xlu0 %1354
        %1356 = vadd.xlane.f32.xlu0 %v1268
        %v1357 = vpop.xlane.xlu0 %1356
        %1358 = vadd.xlane.f32.xlu0 %v1269
        %v1359 = vpop.xlane.xlu0 %1358
        %1360 = vadd.xlane.f32.xlu0 %v1270
        %v1361 = vpop.xlane.xlu0 %1360
        %1362 = vadd.xlane.f32.xlu0 %v1271
        %v1363 = vpop.xlane.xlu0 %1362
        %1364 = vadd.xlane.f32.xlu0 %v1272
        %v1365 = vpop.xlane.xlu0 %1364
        %1366 = vadd.xlane.f32.xlu0 %v1273
        %v1367 = vpop.xlane.xlu0 %1366
        %1368 = vadd.xlane.f32.xlu0 %v1274
        %v1369 = vpop.xlane.xlu0 %1368
        %1370 = vadd.xlane.f32.xlu0 %v1275
        %v1371 = vpop.xlane.xlu0 %1370
        %1372 = vadd.xlane.f32.xlu0 %v1276
        %v1373 = vpop.xlane.xlu0 %1372
        %1374 = vadd.xlane.f32.xlu0 %v1277
        %v1375 = vpop.xlane.xlu0 %1374
        %1376 = vadd.xlane.f32.xlu0 %v1278
        %v1377 = vpop.xlane.xlu0 %1376
        %1378 = vadd.xlane.f32.xlu0 %v1279
        %v1379 = vpop.xlane.xlu0 %1378
        %1380 = vadd.xlane.f32.xlu0 %v1280
        %v1381 = vpop.xlane.xlu0 %1380
        %1382 = vadd.xlane.f32.xlu0 %v1281
        %v1383 = vpop.xlane.xlu0 %1382
        %1384 = vadd.xlane.f32.xlu0 %v1282
        %v1385 = vpop.xlane.xlu0 %1384
        %1386 = vadd.xlane.f32.xlu0 %v1283
        %v1387 = vpop.xlane.xlu0 %1386
        %1388 = vadd.xlane.f32.xlu0 %v1284
        %v1389 = vpop.xlane.xlu0 %1388
        %1390 = vadd.xlane.f32.xlu0 %v1285
        %v1391 = vpop.xlane.xlu0 %1390
        %1392 = vadd.xlane.f32.xlu0 %v1286
        %v1393 = vpop.xlane.xlu0 %1392
        %1394 = vadd.xlane.f32.xlu0 %v1287
        %v1395 = vpop.xlane.xlu0 %1394
        %1396 = vadd.xlane.f32.xlu0 %v1288
        %v1397 = vpop.xlane.xlu0 %1396
        %1398 = vadd.xlane.f32.xlu0 %v1289
        %v1399 = vpop.xlane.xlu0 %1398
        %1400 = vadd.xlane.f32.xlu0 %v1290
        %v1401 = vpop.xlane.xlu0 %1400
        %1402 = vadd.xlane.f32.xlu0 %v1291
        %v1403 = vpop.xlane.xlu0 %1402
        %1404 = vadd.xlane.f32.xlu0 %v1292
        %v1405 = vpop.xlane.xlu0 %1404
        %1406 = vadd.xlane.f32.xlu0 %v1293
        %v1407 = vpop.xlane.xlu0 %1406
        %1408 = vadd.xlane.f32.xlu0 %v1294
        %v1409 = vpop.xlane.xlu0 %1408
        %1410 = vadd.xlane.f32.xlu0 %v1295
        %v1411 = vpop.xlane.xlu0 %1410
        %1412 = vadd.xlane.f32.xlu0 %v1296
        %v1413 = vpop.xlane.xlu0 %1412
        %1414 = vadd.xlane.f32.xlu0 %v1297
        %v1415 = vpop.xlane.xlu0 %1414
        %1416 = vadd.xlane.f32.xlu0 %v1298
        %v1417 = vpop.xlane.xlu0 %1416
        %1418 = vadd.xlane.f32.xlu0 %v1299
        %v1419 = vpop.xlane.xlu0 %1418
        %1420 = vadd.xlane.f32.xlu0 %v1300
        %v1421 = vpop.xlane.xlu0 %1420
        %1422 = vadd.xlane.f32.xlu0 %v1301
        %v1423 = vpop.xlane.xlu0 %1422
        %1424 = vadd.xlane.f32.xlu0 %v1302
        %v1425 = vpop.xlane.xlu0 %1424
        %1426 = vadd.xlane.f32.xlu0 %v1303
        %v1427 = vpop.xlane.xlu0 %1426
        %1428 = vadd.xlane.f32.xlu0 %v1304
        %v1429 = vpop.xlane.xlu0 %1428
        %1430 = vadd.xlane.f32.xlu0 %v1305
        %v1431 = vpop.xlane.xlu0 %1430
        %1432 = vadd.xlane.f32.xlu0 %v1306
        %v1433 = vpop.xlane.xlu0 %1432
        %1434 = vadd.xlane.f32.xlu0 %v1307
        %v1435 = vpop.xlane.xlu0 %1434
        %1436 = vxpose.xlu0.b32.start [1/16] %v1309, 128
        %1437 = vxpose.xlu0.b32.cont [2/16] %v1311, 128
        %1438 = vxpose.xlu0.b32.cont [3/16] %v1313, 128
        %1439 = vxpose.xlu0.b32.cont [4/16] %v1315, 128
        %1440 = vxpose.xlu0.b32.cont [5/16] %v1317, 128
        %1441 = vxpose.xlu0.b32.cont [6/16] %v1319, 128
        %1442 = vxpose.xlu0.b32.cont [7/16] %v1321, 128
        %1443 = vxpose.xlu0.b32.cont [8/16] %v1323, 128
        %1444 = vxpose.xlu0.b32.cont [9/16] %v1325, 128
        %1445 = vxpose.xlu0.b32.cont [10/16] %v1327, 128
        %1446 = vxpose.xlu0.b32.cont [11/16] %v1329, 128
        %1447 = vxpose.xlu0.b32.cont [12/16] %v1331, 128
        %1448 = vxpose.xlu0.b32.cont [13/16] %v1333, 128
        %1449 = vxpose.xlu0.b32.cont [14/16] %v1335, 128
        %1450 = vxpose.xlu0.b32.cont [15/16] %v1337, 128
        %1451 = vxpose.xlu0.b32.end [16/16] %v1339, 128
        %v1452 = vpop.trf.xlu0
        %v1453 = vpop.trf.xlu0
        %v1454 = vpop.trf.xlu0
        %v1455 = vpop.trf.xlu0
        %v1456 = vpop.trf.xlu0
        %v1457 = vpop.trf.xlu0
        %v1458 = vpop.trf.xlu0
        %v1459 = vpop.trf.xlu0
        %v1460 = vpop.trf.xlu0
        %v1461 = vpop.trf.xlu0
        %v1462 = vpop.trf.xlu0
        %v1463 = vpop.trf.xlu0
        %v1464 = vpop.trf.xlu0
        %v1465 = vpop.trf.xlu0
        %v1466 = vpop.trf.xlu0
        %v1467 = vpop.trf.xlu0
        %1468 = vxpose.xlu0.b32.start [1/16] %v1341, 128
        %1469 = vxpose.xlu0.b32.cont [2/16] %v1343, 128
        %1470 = vxpose.xlu0.b32.cont [3/16] %v1345, 128
        %1471 = vxpose.xlu0.b32.cont [4/16] %v1347, 128
        %1472 = vxpose.xlu0.b32.cont [5/16] %v1349, 128
        %1473 = vxpose.xlu0.b32.cont [6/16] %v1351, 128
        %1474 = vxpose.xlu0.b32.cont [7/16] %v1353, 128
        %1475 = vxpose.xlu0.b32.cont [8/16] %v1355, 128
        %1476 = vxpose.xlu0.b32.cont [9/16] %v1357, 128
        %1477 = vxpose.xlu0.b32.cont [10/16] %v1359, 128
        %1478 = vxpose.xlu0.b32.cont [11/16] %v1361, 128
        %1479 = vxpose.xlu0.b32.cont [12/16] %v1363, 128
        %1480 = vxpose.xlu0.b32.cont [13/16] %v1365, 128
        %1481 = vxpose.xlu0.b32.cont [14/16] %v1367, 128
        %1482 = vxpose.xlu0.b32.cont [15/16] %v1369, 128
        %1483 = vxpose.xlu0.b32.end [16/16] %v1371, 128
        %v1484 = vpop.trf.xlu0
        %v1485 = vpop.trf.xlu0
        %v1486 = vpop.trf.xlu0
        %v1487 = vpop.trf.xlu0
        %v1488 = vpop.trf.xlu0
        %v1489 = vpop.trf.xlu0
        %v1490 = vpop.trf.xlu0
        %v1491 = vpop.trf.xlu0
        %v1492 = vpop.trf.xlu0
        %v1493 = vpop.trf.xlu0
        %v1494 = vpop.trf.xlu0
        %v1495 = vpop.trf.xlu0
        %v1496 = vpop.trf.xlu0
        %v1497 = vpop.trf.xlu0
        %v1498 = vpop.trf.xlu0
        %v1499 = vpop.trf.xlu0
        %1500 = vxpose.xlu0.b32.start [1/16] %v1373, 128
        %1501 = vxpose.xlu0.b32.cont [2/16] %v1375, 128
        %1502 = vxpose.xlu0.b32.cont [3/16] %v1377, 128
        %1503 = vxpose.xlu0.b32.cont [4/16] %v1379, 128
        %1504 = vxpose.xlu0.b32.cont [5/16] %v1381, 128
        %1505 = vxpose.xlu0.b32.cont [6/16] %v1383, 128
        %1506 = vxpose.xlu0.b32.cont [7/16] %v1385, 128
        %1507 = vxpose.xlu0.b32.cont [8/16] %v1387, 128
        %1508 = vxpose.xlu0.b32.cont [9/16] %v1389, 128
        %1509 = vxpose.xlu0.b32.cont [10/16] %v1391, 128
        %1510 = vxpose.xlu0.b32.cont [11/16] %v1393, 128
        %1511 = vxpose.xlu0.b32.cont [12/16] %v1395, 128
        %1512 = vxpose.xlu0.b32.cont [13/16] %v1397, 128
        %1513 = vxpose.xlu0.b32.cont [14/16] %v1399, 128
        %1514 = vxpose.xlu0.b32.cont [15/16] %v1401, 128
        %1515 = vxpose.xlu0.b32.end [16/16] %v1403, 128
        %v1516 = vpop.trf.xlu0
        %v1517 = vpop.trf.xlu0
        %v1518 = vpop.trf.xlu0
        %v1519 = vpop.trf.xlu0
        %v1520 = vpop.trf.xlu0
        %v1521 = vpop.trf.xlu0
        %v1522 = vpop.trf.xlu0
        %v1523 = vpop.trf.xlu0
        %v1524 = vpop.trf.xlu0
        %v1525 = vpop.trf.xlu0
        %v1526 = vpop.trf.xlu0
        %v1527 = vpop.trf.xlu0
        %v1528 = vpop.trf.xlu0
        %v1529 = vpop.trf.xlu0
        %v1530 = vpop.trf.xlu0
        %v1531 = vpop.trf.xlu0
        %1532 = vxpose.xlu0.b32.start [1/16] %v1405, 128
        %1533 = vxpose.xlu0.b32.cont [2/16] %v1407, 128
        %1534 = vxpose.xlu0.b32.cont [3/16] %v1409, 128
        %1535 = vxpose.xlu0.b32.cont [4/16] %v1411, 128
        %1536 = vxpose.xlu0.b32.cont [5/16] %v1413, 128
        %1537 = vxpose.xlu0.b32.cont [6/16] %v1415, 128
        %1538 = vxpose.xlu0.b32.cont [7/16] %v1417, 128
        %1539 = vxpose.xlu0.b32.cont [8/16] %v1419, 128
        %1540 = vxpose.xlu0.b32.cont [9/16] %v1421, 128
        %1541 = vxpose.xlu0.b32.cont [10/16] %v1423, 128
        %1542 = vxpose.xlu0.b32.cont [11/16] %v1425, 128
        %1543 = vxpose.xlu0.b32.cont [12/16] %v1427, 128
        %1544 = vxpose.xlu0.b32.cont [13/16] %v1429, 128
        %1545 = vxpose.xlu0.b32.cont [14/16] %v1431, 128
        %1546 = vxpose.xlu0.b32.cont [15/16] %v1433, 128
        %1547 = vxpose.xlu0.b32.end [16/16] %v1435, 128
        %v1548 = vpop.trf.xlu0
        %v1549 = vpop.trf.xlu0
        %v1550 = vpop.trf.xlu0
        %v1551 = vpop.trf.xlu0
        %v1552 = vpop.trf.xlu0
        %v1553 = vpop.trf.xlu0
        %v1554 = vpop.trf.xlu0
        %v1555 = vpop.trf.xlu0
        %v1556 = vpop.trf.xlu0
        %v1557 = vpop.trf.xlu0
        %v1558 = vpop.trf.xlu0
        %v1559 = vpop.trf.xlu0
        %v1560 = vpop.trf.xlu0
        %v1561 = vpop.trf.xlu0
        %v1562 = vpop.trf.xlu0
        %v1563 = vpop.trf.xlu0
        %v1568 = vcombine.low %v1452, %v1484
        %v1569 = vcombine.low %v1516, %v1548
        %v1571 = vunpack.c.l.s4 1966171168
        %v1572 = vunpack.c.0.s8 %v1571
        %v1573 = vlaneseq
        %v1574 = vshrl.u32 %v1573, 7
        %v1575 = vsub.s32 %v1572, %v1574
        %v1576 = vrot.slane %v1568, %v1575
        %v1578 = vunpack.c.l.s4 1966171168
        %v1579 = vunpack.c.0.s8 %v1578
        %v1580 = vlaneseq
        %v1581 = vshrl.u32 %v1580, 7
        %v1582 = vsub.s32 %v1579, %v1581
        %v1583 = vrot.slane %v1569, %v1582
        %v1584 = vcombine.low %v1576, %v1583
        %v1586 = vunpack.c.l.s4 1966171168
        %v1587 = vunpack.c.0.s8 %v1586
        %v1588 = vlaneseq
        %v1589 = vshrl.u32 %v1588, 7
        %v1590 = vsub.s32 %v1587, %v1589
        %v1591 = vrot.slane %v1584, %v1590
        %v1593 = vlaneseq
        %vm1594 = vcmp.ge.s32.totalorder %v1593, 0
        %vm1595 = vcmp.lt.s32.totalorder %v1593, 512
        %vm1596 = vmand %vm1594, %vm1595
        %1597 = vst.msk [vmem:[%s256] sm:$0xf] %vm1596, %v1591
        %v1598 = vld [vmem:[%s3] sm:$0x1]
        %v1600 = vlaneseq
        %v1601 = vshrl.u32 %v1600, 7
        %v1602 = vsub.s32 0, %v1601
        %v1603 = vrot.slane %v1598, %v1602
        %v1605 = vmul.f32 %v599, %v1603
        %v1606 = vmul.f32 %v604, %v1603
        %v1607 = vmul.f32 %v609, %v1603
        %v1608 = vmul.f32 %v614, %v1603
        %v1609 = vmul.f32 %v619, %v1603
        %v1610 = vmul.f32 %v624, %v1603
        %v1611 = vmul.f32 %v629, %v1603
        %v1612 = vmul.f32 %v634, %v1603
        %v1613 = vmul.f32 %v639, %v1603
        %v1614 = vmul.f32 %v644, %v1603
        %v1615 = vmul.f32 %v649, %v1603
        %v1616 = vmul.f32 %v654, %v1603
        %v1617 = vmul.f32 %v659, %v1603
        %v1618 = vmul.f32 %v664, %v1603
        %v1619 = vmul.f32 %v669, %v1603
        %v1620 = vmul.f32 %v674, %v1603
        %v1621 = vmul.f32 %v679, %v1603
        %v1622 = vmul.f32 %v684, %v1603
        %v1623 = vmul.f32 %v689, %v1603
        %v1624 = vmul.f32 %v694, %v1603
        %v1625 = vmul.f32 %v699, %v1603
        %v1626 = vmul.f32 %v704, %v1603
        %v1627 = vmul.f32 %v709, %v1603
        %v1628 = vmul.f32 %v714, %v1603
        %v1629 = vmul.f32 %v719, %v1603
        %v1630 = vmul.f32 %v724, %v1603
        %v1631 = vmul.f32 %v729, %v1603
        %v1632 = vmul.f32 %v734, %v1603
        %v1633 = vmul.f32 %v739, %v1603
        %v1634 = vmul.f32 %v744, %v1603
        %v1635 = vmul.f32 %v749, %v1603
        %v1636 = vmul.f32 %v754, %v1603
        %v1637 = vmul.f32 %v759, %v1603
        %v1638 = vmul.f32 %v764, %v1603
        %v1639 = vmul.f32 %v769, %v1603
        %v1640 = vmul.f32 %v774, %v1603
        %v1641 = vmul.f32 %v779, %v1603
        %v1642 = vmul.f32 %v784, %v1603
        %v1643 = vmul.f32 %v789, %v1603
        %v1644 = vmul.f32 %v794, %v1603
        %v1645 = vmul.f32 %v799, %v1603
        %v1646 = vmul.f32 %v804, %v1603
        %v1647 = vmul.f32 %v809, %v1603
        %v1648 = vmul.f32 %v814, %v1603
        %v1649 = vmul.f32 %v819, %v1603
        %v1650 = vmul.f32 %v824, %v1603
        %v1651 = vmul.f32 %v829, %v1603
        %v1652 = vmul.f32 %v834, %v1603
        %v1653 = vmul.f32 %v839, %v1603
        %v1654 = vmul.f32 %v844, %v1603
        %v1655 = vmul.f32 %v849, %v1603
        %v1656 = vmul.f32 %v854, %v1603
        %v1657 = vmul.f32 %v859, %v1603
        %v1658 = vmul.f32 %v864, %v1603
        %v1659 = vmul.f32 %v869, %v1603
        %v1660 = vmul.f32 %v874, %v1603
        %v1661 = vmul.f32 %v879, %v1603
        %v1662 = vmul.f32 %v884, %v1603
        %v1663 = vmul.f32 %v889, %v1603
        %v1664 = vmul.f32 %v894, %v1603
        %v1665 = vmul.f32 %v899, %v1603
        %v1666 = vmul.f32 %v904, %v1603
        %v1667 = vmul.f32 %v909, %v1603
        %v1668 = vmul.f32 %v914, %v1603
        %1669 = vadd.xlane.f32.xlu0 %v1605
        %v1670 = vpop.xlane.xlu0 %1669
        %1671 = vadd.xlane.f32.xlu0 %v1606
        %v1672 = vpop.xlane.xlu0 %1671
        %1673 = vadd.xlane.f32.xlu0 %v1607
        %v1674 = vpop.xlane.xlu0 %1673
        %1675 = vadd.xlane.f32.xlu0 %v1608
        %v1676 = vpop.xlane.xlu0 %1675
        %1677 = vadd.xlane.f32.xlu0 %v1609
        %v1678 = vpop.xlane.xlu0 %1677
        %1679 = vadd.xlane.f32.xlu0 %v1610
        %v1680 = vpop.xlane.xlu0 %1679
        %1681 = vadd.xlane.f32.xlu0 %v1611
        %v1682 = vpop.xlane.xlu0 %1681
        %1683 = vadd.xlane.f32.xlu0 %v1612
        %v1684 = vpop.xlane.xlu0 %1683
        %1685 = vadd.xlane.f32.xlu0 %v1613
        %v1686 = vpop.xlane.xlu0 %1685
        %1687 = vadd.xlane.f32.xlu0 %v1614
        %v1688 = vpop.xlane.xlu0 %1687
        %1689 = vadd.xlane.f32.xlu0 %v1615
        %v1690 = vpop.xlane.xlu0 %1689
        %1691 = vadd.xlane.f32.xlu0 %v1616
        %v1692 = vpop.xlane.xlu0 %1691
        %1693 = vadd.xlane.f32.xlu0 %v1617
        %v1694 = vpop.xlane.xlu0 %1693
        %1695 = vadd.xlane.f32.xlu0 %v1618
        %v1696 = vpop.xlane.xlu0 %1695
        %1697 = vadd.xlane.f32.xlu0 %v1619
        %v1698 = vpop.xlane.xlu0 %1697
        %1699 = vadd.xlane.f32.xlu0 %v1620
        %v1700 = vpop.xlane.xlu0 %1699
        %1701 = vadd.xlane.f32.xlu0 %v1621
        %v1702 = vpop.xlane.xlu0 %1701
        %1703 = vadd.xlane.f32.xlu0 %v1622
        %v1704 = vpop.xlane.xlu0 %1703
        %1705 = vadd.xlane.f32.xlu0 %v1623
        %v1706 = vpop.xlane.xlu0 %1705
        %1707 = vadd.xlane.f32.xlu0 %v1624
        %v1708 = vpop.xlane.xlu0 %1707
        %1709 = vadd.xlane.f32.xlu0 %v1625
        %v1710 = vpop.xlane.xlu0 %1709
        %1711 = vadd.xlane.f32.xlu0 %v1626
        %v1712 = vpop.xlane.xlu0 %1711
        %1713 = vadd.xlane.f32.xlu0 %v1627
        %v1714 = vpop.xlane.xlu0 %1713
        %1715 = vadd.xlane.f32.xlu0 %v1628
        %v1716 = vpop.xlane.xlu0 %1715
        %1717 = vadd.xlane.f32.xlu0 %v1629
        %v1718 = vpop.xlane.xlu0 %1717
        %1719 = vadd.xlane.f32.xlu0 %v1630
        %v1720 = vpop.xlane.xlu0 %1719
        %1721 = vadd.xlane.f32.xlu0 %v1631
        %v1722 = vpop.xlane.xlu0 %1721
        %1723 = vadd.xlane.f32.xlu0 %v1632
        %v1724 = vpop.xlane.xlu0 %1723
        %1725 = vadd.xlane.f32.xlu0 %v1633
        %v1726 = vpop.xlane.xlu0 %1725
        %1727 = vadd.xlane.f32.xlu0 %v1634
        %v1728 = vpop.xlane.xlu0 %1727
        %1729 = vadd.xlane.f32.xlu0 %v1635
        %v1730 = vpop.xlane.xlu0 %1729
        %1731 = vadd.xlane.f32.xlu0 %v1636
        %v1732 = vpop.xlane.xlu0 %1731
        %1733 = vadd.xlane.f32.xlu0 %v1637
        %v1734 = vpop.xlane.xlu0 %1733
        %1735 = vadd.xlane.f32.xlu0 %v1638
        %v1736 = vpop.xlane.xlu0 %1735
        %1737 = vadd.xlane.f32.xlu0 %v1639
        %v1738 = vpop.xlane.xlu0 %1737
        %1739 = vadd.xlane.f32.xlu0 %v1640
        %v1740 = vpop.xlane.xlu0 %1739
        %1741 = vadd.xlane.f32.xlu0 %v1641
        %v1742 = vpop.xlane.xlu0 %1741
        %1743 = vadd.xlane.f32.xlu0 %v1642
        %v1744 = vpop.xlane.xlu0 %1743
        %1745 = vadd.xlane.f32.xlu0 %v1643
        %v1746 = vpop.xlane.xlu0 %1745
        %1747 = vadd.xlane.f32.xlu0 %v1644
        %v1748 = vpop.xlane.xlu0 %1747
        %1749 = vadd.xlane.f32.xlu0 %v1645
        %v1750 = vpop.xlane.xlu0 %1749
        %1751 = vadd.xlane.f32.xlu0 %v1646
        %v1752 = vpop.xlane.xlu0 %1751
        %1753 = vadd.xlane.f32.xlu0 %v1647
        %v1754 = vpop.xlane.xlu0 %1753
        %1755 = vadd.xlane.f32.xlu0 %v1648
        %v1756 = vpop.xlane.xlu0 %1755
        %1757 = vadd.xlane.f32.xlu0 %v1649
        %v1758 = vpop.xlane.xlu0 %1757
        %1759 = vadd.xlane.f32.xlu0 %v1650
        %v1760 = vpop.xlane.xlu0 %1759
        %1761 = vadd.xlane.f32.xlu0 %v1651
        %v1762 = vpop.xlane.xlu0 %1761
        %1763 = vadd.xlane.f32.xlu0 %v1652
        %v1764 = vpop.xlane.xlu0 %1763
        %1765 = vadd.xlane.f32.xlu0 %v1653
        %v1766 = vpop.xlane.xlu0 %1765
        %1767 = vadd.xlane.f32.xlu0 %v1654
        %v1768 = vpop.xlane.xlu0 %1767
        %1769 = vadd.xlane.f32.xlu0 %v1655
        %v1770 = vpop.xlane.xlu0 %1769
        %1771 = vadd.xlane.f32.xlu0 %v1656
        %v1772 = vpop.xlane.xlu0 %1771
        %1773 = vadd.xlane.f32.xlu0 %v1657
        %v1774 = vpop.xlane.xlu0 %1773
        %1775 = vadd.xlane.f32.xlu0 %v1658
        %v1776 = vpop.xlane.xlu0 %1775
        %1777 = vadd.xlane.f32.xlu0 %v1659
        %v1778 = vpop.xlane.xlu0 %1777
        %1779 = vadd.xlane.f32.xlu0 %v1660
        %v1780 = vpop.xlane.xlu0 %1779
        %1781 = vadd.xlane.f32.xlu0 %v1661
        %v1782 = vpop.xlane.xlu0 %1781
        %1783 = vadd.xlane.f32.xlu0 %v1662
        %v1784 = vpop.xlane.xlu0 %1783
        %1785 = vadd.xlane.f32.xlu0 %v1663
        %v1786 = vpop.xlane.xlu0 %1785
        %1787 = vadd.xlane.f32.xlu0 %v1664
        %v1788 = vpop.xlane.xlu0 %1787
        %1789 = vadd.xlane.f32.xlu0 %v1665
        %v1790 = vpop.xlane.xlu0 %1789
        %1791 = vadd.xlane.f32.xlu0 %v1666
        %v1792 = vpop.xlane.xlu0 %1791
        %1793 = vadd.xlane.f32.xlu0 %v1667
        %v1794 = vpop.xlane.xlu0 %1793
        %1795 = vadd.xlane.f32.xlu0 %v1668
        %v1796 = vpop.xlane.xlu0 %1795
        %1797 = vxpose.xlu0.b32.start [1/16] %v1670, 128
        %1798 = vxpose.xlu0.b32.cont [2/16] %v1672, 128
        %1799 = vxpose.xlu0.b32.cont [3/16] %v1674, 128
        %1800 = vxpose.xlu0.b32.cont [4/16] %v1676, 128
        %1801 = vxpose.xlu0.b32.cont [5/16] %v1678, 128
        %1802 = vxpose.xlu0.b32.cont [6/16] %v1680, 128
        %1803 = vxpose.xlu0.b32.cont [7/16] %v1682, 128
        %1804 = vxpose.xlu0.b32.cont [8/16] %v1684, 128
        %1805 = vxpose.xlu0.b32.cont [9/16] %v1686, 128
        %1806 = vxpose.xlu0.b32.cont [10/16] %v1688, 128
        %1807 = vxpose.xlu0.b32.cont [11/16] %v1690, 128
        %1808 = vxpose.xlu0.b32.cont [12/16] %v1692, 128
        %1809 = vxpose.xlu0.b32.cont [13/16] %v1694, 128
        %1810 = vxpose.xlu0.b32.cont [14/16] %v1696, 128
        %1811 = vxpose.xlu0.b32.cont [15/16] %v1698, 128
        %1812 = vxpose.xlu0.b32.end [16/16] %v1700, 128
        %v1813 = vpop.trf.xlu0
        %v1814 = vpop.trf.xlu0
        %v1815 = vpop.trf.xlu0
        %v1816 = vpop.trf.xlu0
        %v1817 = vpop.trf.xlu0
        %v1818 = vpop.trf.xlu0
        %v1819 = vpop.trf.xlu0
        %v1820 = vpop.trf.xlu0
        %v1821 = vpop.trf.xlu0
        %v1822 = vpop.trf.xlu0
        %v1823 = vpop.trf.xlu0
        %v1824 = vpop.trf.xlu0
        %v1825 = vpop.trf.xlu0
        %v1826 = vpop.trf.xlu0
        %v1827 = vpop.trf.xlu0
        %v1828 = vpop.trf.xlu0
        %1829 = vxpose.xlu0.b32.start [1/16] %v1702, 128
        %1830 = vxpose.xlu0.b32.cont [2/16] %v1704, 128
        %1831 = vxpose.xlu0.b32.cont [3/16] %v1706, 128
        %1832 = vxpose.xlu0.b32.cont [4/16] %v1708, 128
        %1833 = vxpose.xlu0.b32.cont [5/16] %v1710, 128
        %1834 = vxpose.xlu0.b32.cont [6/16] %v1712, 128
        %1835 = vxpose.xlu0.b32.cont [7/16] %v1714, 128
        %1836 = vxpose.xlu0.b32.cont [8/16] %v1716, 128
        %1837 = vxpose.xlu0.b32.cont [9/16] %v1718, 128
        %1838 = vxpose.xlu0.b32.cont [10/16] %v1720, 128
        %1839 = vxpose.xlu0.b32.cont [11/16] %v1722, 128
        %1840 = vxpose.xlu0.b32.cont [12/16] %v1724, 128
        %1841 = vxpose.xlu0.b32.cont [13/16] %v1726, 128
        %1842 = vxpose.xlu0.b32.cont [14/16] %v1728, 128
        %1843 = vxpose.xlu0.b32.cont [15/16] %v1730, 128
        %1844 = vxpose.xlu0.b32.end [16/16] %v1732, 128
        %v1845 = vpop.trf.xlu0
        %v1846 = vpop.trf.xlu0
        %v1847 = vpop.trf.xlu0
        %v1848 = vpop.trf.xlu0
        %v1849 = vpop.trf.xlu0
        %v1850 = vpop.trf.xlu0
        %v1851 = vpop.trf.xlu0
        %v1852 = vpop.trf.xlu0
        %v1853 = vpop.trf.xlu0
        %v1854 = vpop.trf.xlu0
        %v1855 = vpop.trf.xlu0
        %v1856 = vpop.trf.xlu0
        %v1857 = vpop.trf.xlu0
        %v1858 = vpop.trf.xlu0
        %v1859 = vpop.trf.xlu0
        %v1860 = vpop.trf.xlu0
        %1861 = vxpose.xlu0.b32.start [1/16] %v1734, 128
        %1862 = vxpose.xlu0.b32.cont [2/16] %v1736, 128
        %1863 = vxpose.xlu0.b32.cont [3/16] %v1738, 128
        %1864 = vxpose.xlu0.b32.cont [4/16] %v1740, 128
        %1865 = vxpose.xlu0.b32.cont [5/16] %v1742, 128
        %1866 = vxpose.xlu0.b32.cont [6/16] %v1744, 128
        %1867 = vxpose.xlu0.b32.cont [7/16] %v1746, 128
        %1868 = vxpose.xlu0.b32.cont [8/16] %v1748, 128
        %1869 = vxpose.xlu0.b32.cont [9/16] %v1750, 128
        %1870 = vxpose.xlu0.b32.cont [10/16] %v1752, 128
        %1871 = vxpose.xlu0.b32.cont [11/16] %v1754, 128
        %1872 = vxpose.xlu0.b32.cont [12/16] %v1756, 128
        %1873 = vxpose.xlu0.b32.cont [13/16] %v1758, 128
        %1874 = vxpose.xlu0.b32.cont [14/16] %v1760, 128
        %1875 = vxpose.xlu0.b32.cont [15/16] %v1762, 128
        %1876 = vxpose.xlu0.b32.end [16/16] %v1764, 128
        %v1877 = vpop.trf.xlu0
        %v1878 = vpop.trf.xlu0
        %v1879 = vpop.trf.xlu0
        %v1880 = vpop.trf.xlu0
        %v1881 = vpop.trf.xlu0
        %v1882 = vpop.trf.xlu0
        %v1883 = vpop.trf.xlu0
        %v1884 = vpop.trf.xlu0
        %v1885 = vpop.trf.xlu0
        %v1886 = vpop.trf.xlu0
        %v1887 = vpop.trf.xlu0
        %v1888 = vpop.trf.xlu0
        %v1889 = vpop.trf.xlu0
        %v1890 = vpop.trf.xlu0
        %v1891 = vpop.trf.xlu0
        %v1892 = vpop.trf.xlu0
        %1893 = vxpose.xlu0.b32.start [1/16] %v1766, 128
        %1894 = vxpose.xlu0.b32.cont [2/16] %v1768, 128
        %1895 = vxpose.xlu0.b32.cont [3/16] %v1770, 128
        %1896 = vxpose.xlu0.b32.cont [4/16] %v1772, 128
        %1897 = vxpose.xlu0.b32.cont [5/16] %v1774, 128
        %1898 = vxpose.xlu0.b32.cont [6/16] %v1776, 128
        %1899 = vxpose.xlu0.b32.cont [7/16] %v1778, 128
        %1900 = vxpose.xlu0.b32.cont [8/16] %v1780, 128
        %1901 = vxpose.xlu0.b32.cont [9/16] %v1782, 128
        %1902 = vxpose.xlu0.b32.cont [10/16] %v1784, 128
        %1903 = vxpose.xlu0.b32.cont [11/16] %v1786, 128
        %1904 = vxpose.xlu0.b32.cont [12/16] %v1788, 128
        %1905 = vxpose.xlu0.b32.cont [13/16] %v1790, 128
        %1906 = vxpose.xlu0.b32.cont [14/16] %v1792, 128
        %1907 = vxpose.xlu0.b32.cont [15/16] %v1794, 128
        %1908 = vxpose.xlu0.b32.end [16/16] %v1796, 128
        %v1909 = vpop.trf.xlu0
        %v1910 = vpop.trf.xlu0
        %v1911 = vpop.trf.xlu0
        %v1912 = vpop.trf.xlu0
        %v1913 = vpop.trf.xlu0
        %v1914 = vpop.trf.xlu0
        %v1915 = vpop.trf.xlu0
        %v1916 = vpop.trf.xlu0
        %v1917 = vpop.trf.xlu0
        %v1918 = vpop.trf.xlu0
        %v1919 = vpop.trf.xlu0
        %v1920 = vpop.trf.xlu0
        %v1921 = vpop.trf.xlu0
        %v1922 = vpop.trf.xlu0
        %v1923 = vpop.trf.xlu0
        %v1924 = vpop.trf.xlu0
        %v1929 = vcombine.low %v1813, %v1845
        %v1930 = vcombine.low %v1877, %v1909
        %v1932 = vunpack.c.l.s4 1966171168
        %v1933 = vunpack.c.0.s8 %v1932
        %v1934 = vlaneseq
        %v1935 = vshrl.u32 %v1934, 7
        %v1936 = vsub.s32 %v1933, %v1935
        %v1937 = vrot.slane %v1929, %v1936
        %v1939 = vunpack.c.l.s4 1966171168
        %v1940 = vunpack.c.0.s8 %v1939
        %v1941 = vlaneseq
        %v1942 = vshrl.u32 %v1941, 7
        %v1943 = vsub.s32 %v1940, %v1942
        %v1944 = vrot.slane %v1930, %v1943
        %v1945 = vcombine.low %v1937, %v1944
        %v1947 = vunpack.c.l.s4 1966171168
        %v1948 = vunpack.c.0.s8 %v1947
        %v1949 = vlaneseq
        %v1950 = vshrl.u32 %v1949, 7
        %v1951 = vsub.s32 %v1948, %v1950
        %v1952 = vrot.slane %v1945, %v1951
        %1954 = vst.msk [vmem:[%s263] sm:$0xf] %vm1596, %v1952
        %s1955 = sand.u32 %s121, 1
        %s1956 = scalar_lea.sflag [#allocation3], %s1955
        %s1957 = sand.u32 %s121, 1
        %s1958 = smul.addr %s1957, 256
        %s1959 = scalar_lea.vmem [#allocation2], %s1958
        %s1960 = sand.u32 %s24, 1
        %s1961 = scalar_lea.sflag [#allocation5], %s1960
        %s1962 = sand.u32 %s147, 1
        %s1963 = smul.addr %s1962, 4
        %s1964 = scalar_lea.vmem [#allocation4], %s1963
        %s1965 = sand.u32 %s24, 1
        %s1966 = scalar_lea.sflag [#allocation5], %s1965
        %s1967 = sand.u32 %s173, 1
        %s1968 = smul.addr %s1967, 4
        %s1969 = scalar_lea.vmem [#allocation6], %s1968
        // Predicated region
        $region37: #{tpu_custom_call.1} parent=35 // pred_check
          %p1970 = pneg %p131
        $region38: #{tpu_custom_call.1} parent=35 // pred_check_branch
          %1972 = sbr.rel (%p1970) target = $region40
        $region39: #{tpu_custom_call.1} parent=35 // pred_region
          %s1973 = smul.u32 64, %s24
          %s1975 = ssub.s32 4096, 4096
          %1976 = vsyncadd %s1956, %s1975
          %s1977 = smul.addr %s1973, 64
          %s1978 = scalar_lea.hbm %s4, %s1977
          %s1979 = sshll.u32 %s1959, 4
          %s1980 = int_to_ptr.vmem [resolvable:$true] %s1979
          %1985 = dma.vmem_to_hbm [thread:$0]  %s1980, 4096, %s1978, %s1956, 64, 64, 4
        $region40: #{tpu_custom_call.1} parent=35 // pred_fallthru
          _
        // Predicated region
        $region41: #{tpu_custom_call.1} parent=35 // pred_check
          %p1986 = pneg %p157
        $region42: #{tpu_custom_call.1} parent=35 // pred_check_branch
          %1988 = sbr.rel (%p1986) target = $region44
        $region43: #{tpu_custom_call.1} parent=35 // pred_region
          %s1989 = smul.u32 4, %s24
          %s1991 = ssub.s32 64, 64
          %1992 = vsyncadd %s1961, %s1991
          %s1993 = smul.addr %s1989, 16
          %s1994 = scalar_lea.hbm %s5, %s1993
          %s1996 = sshll.u32 %s1964, 4
          %s1997 = int_to_ptr.vmem [resolvable:$true] %s1996
          %1999 = dma.vmem_to_hbm [thread:$0]  %s1997, 64, %s1994, %s1961
        $region44: #{tpu_custom_call.1} parent=35 // pred_fallthru
          _
        // Predicated region
        $region45: #{tpu_custom_call.1} parent=35 // pred_check
          %p2000 = pneg %p183
        $region46: #{tpu_custom_call.1} parent=35 // pred_check_branch
          %2002 = sbr.rel (%p2000) target = $region48
        $region47: #{tpu_custom_call.1} parent=35 // pred_region
          %s2003 = smul.u32 4, %s24
          %s2005 = ssub.s32 64, 64
          %2006 = vsyncadd %s1966, %s2005
          %s2007 = smul.addr %s2003, 16
          %s2008 = scalar_lea.hbm %s6, %s2007
          %s2010 = sshll.u32 %s1969, 4
          %s2011 = int_to_ptr.vmem [resolvable:$true] %s2010
          %2013 = dma.vmem_to_hbm [thread:$0]  %s2011, 64, %s2008, %s1966
        $region48: #{tpu_custom_call.1} parent=35 // pred_fallthru
          _
      $region36: #{tpu_custom_call.1} parent=5 // pred_fallthru
        _
      %p2014 = scmp.le.s32.totalorder 2, %s19
      // Predicated region
      $region49: #{tpu_custom_call.1} parent=5 // pred_check
        %p2015 = pneg %p2014
      $region50: #{tpu_custom_call.1} parent=5 // pred_check_branch
        %2017 = sbr.rel (%p2015) target = $region52
      $region51: #{tpu_custom_call.1} parent=5 // pred_region
        %s2018 = ssub.s32 %s19, 2
        // Predicated region
        $region53: #{tpu_custom_call.1} parent=51 // pred_check
          %p2019 = pneg %p137
        $region54: #{tpu_custom_call.1} parent=51 // pred_check_branch
          %2021 = sbr.rel (%p2019) target = $region56
        $region55: #{tpu_custom_call.1} parent=51 // pred_region
          %s2022 = sand.u32 %s122, 1
          %s2023 = scalar_lea.sflag [#allocation3], %s2022
          %s2024 = sand.u32 %s122, 1
          %s2025 = smul.addr %s2024, 256
          %s2026 = scalar_lea.vmem [#allocation2], %s2025
          %2027 = dma.done %s2023, 4096
        $region56: #{tpu_custom_call.1} parent=51 // pred_fallthru
          _
        // Predicated region
        $region57: #{tpu_custom_call.1} parent=51 // pred_check
          %p2028 = pneg %p163
        $region58: #{tpu_custom_call.1} parent=51 // pred_check_branch
          %2030 = sbr.rel (%p2028) target = $region60
        $region59: #{tpu_custom_call.1} parent=51 // pred_region
          %s2031 = sand.u32 %s25, 1
          %s2032 = scalar_lea.sflag [#allocation5], %s2031
          %s2033 = sand.u32 %s148, 1
          %s2034 = smul.addr %s2033, 4
          %s2035 = scalar_lea.vmem [#allocation4], %s2034
          %2036 = dma.done %s2032, 64
        $region60: #{tpu_custom_call.1} parent=51 // pred_fallthru
          _
        // Predicated region
        $region61: #{tpu_custom_call.1} parent=51 // pred_check
          %p2037 = pneg %p189
        $region62: #{tpu_custom_call.1} parent=51 // pred_check_branch
          %2039 = sbr.rel (%p2037) target = $region64
        $region63: #{tpu_custom_call.1} parent=51 // pred_region
          %s2040 = sand.u32 %s25, 1
          %s2041 = scalar_lea.sflag [#allocation5], %s2040
          %s2042 = sand.u32 %s174, 1
          %s2043 = smul.addr %s2042, 4
          %s2044 = scalar_lea.vmem [#allocation6], %s2043
          %2045 = dma.done %s2041, 64
        $region64: #{tpu_custom_call.1} parent=51 // pred_fallthru
          _
      $region52: #{tpu_custom_call.1} parent=5 // pred_fallthru
        _
    $region6: #{tpu_custom_call.1} parent=1 // loop_footer
      %s23 = sadd.s32 1, %s19
    $region7: #{tpu_custom_call.1} parent=1 // loop_footer_branch
      %18 = sbr.rel target = $region3
    $region8: #{tpu_custom_call.1} parent=1 // loop_exit
      _
    %2046 = vsyncpa [#allocation3], 1
    %s2047 = scalar_lea.sflag [#allocation3], 1
    %2048 = vsyncpa %s2047, 1
    %2049 = vsyncpa [#allocation5], 1
    %s2050 = scalar_lea.sflag [#allocation5], 1
    %2051 = vsyncpa %s2050, 1

</llo_original>
